<compile_context>
chip_gen: v7x
topology: tpu7x:2x2x1
jax: 0.10.0
libtpu: 0.0.40
codegen_flags: <defaults>
</compile_context>

<pallas_src>
import functools
import math

import jax
import jax.numpy as jnp
from jax.experimental import pallas as pl
from jax.experimental.pallas import tpu as pltpu

D_MODEL = 32
N_HEADS = 4
D_K = D_MODEL // N_HEADS
BATCH = 2
SEQ = 8


def _mha_kernel(x_ref, mask_ref, wqkv_ref, bqkv_ref, wot_ref, bo_ref,
                out_ref, aw_ref, *, n_heads, d_k):
    # Single grid step: full arrays live in VMEM.
    B, S, three_d = x_ref.shape
    D = n_heads * d_k
    BS = B * S

    # Fused QKV projection: one (B*S, 3D) x (3D, 3D) MXU matmul + one bias add.
    x2d = x_ref[...].reshape(BS, three_d)                       # safe leading-dim merge
    qkv = jnp.dot(x2d, wqkv_ref[...],
                  preferred_element_type=jnp.float32) + bqkv_ref[...]
    qkv = qkv.reshape(B, S, three_d)                            # (B, S, 3D)

    neg_mask = mask_ref[...]                                    # (B, S, S), 0 / -1e9
    wot = wot_ref[...]                                          # (D, D), (in, out) layout
    scale = 1.0 / math.sqrt(d_k)

    acc = jnp.zeros((BS, D), jnp.float32)                       # accumulates o @ Wo^T
    head_means = []
    for h in range(n_heads):                                    # static, fully unrolled
        qh = qkv[:, :, h * d_k:(h + 1) * d_k]                   # (B, S, d_k)
        kh = qkv[:, :, D + h * d_k:D + (h + 1) * d_k]
        vh = qkv[:, :, 2 * D + h * d_k:2 * D + (h + 1) * d_k]

        s = jnp.einsum('bqd,bkd->bqk', qh, kh,
                       preferred_element_type=jnp.float32) * scale
        s = s + neg_mask                                        # precomputed additive mask

        # numerically-stable softmax; divide moved to EUP via pl.reciprocal
        s_max = jnp.max(s, axis=-1, keepdims=True)
        e = jnp.exp(s - s_max)
        denom = jnp.sum(e, axis=-1, keepdims=True)
        p = e * pl.reciprocal(denom, approx=False)
        # dropout(p) is identity in eval mode.

        oh = jnp.einsum('bqk,bkd->bqd', p, vh,
                        preferred_element_type=jnp.float32)     # (B, S, d_k)
        head_means.append(jnp.mean(oh, axis=-1))                # (B, S)

        # Output projection accumulated per head -> no concatenate of head outputs.
        acc = acc + jnp.dot(oh.reshape(BS, d_k),
                            wot[h * d_k:(h + 1) * d_k, :],
                            preferred_element_type=jnp.float32)

    out_ref[...] = acc + bo_ref[...]                            # (B*S, D)
    aw_ref[...] = jnp.concatenate(head_means, axis=-1)          # (B, H*S) lane-contiguous


def mha_forward(query, key, value, mask, params):
    B, S, D = query.shape
    h, d_k = N_HEADS, D_K
    wq, bq, wk, bk, wv, bv, wo, bo = params

    # Wrapper-side layout plumbing (free for the kernel):
    x_cat = jnp.concatenate([query, key, value], axis=-1)              # (B, S, 3D)
    w_qkv = jax.scipy.linalg.block_diag(wq.T, wk.T, wv.T)              # (3D, 3D)
    b_qkv = jnp.concatenate([bq, bk, bv], axis=-1)                     # (1, 3D)
    wo_t = wo.T                                                        # (D, D)
    neg_mask = jnp.where(mask[:, 0] == 0, -1000000000.0, 0.0).astype(jnp.float32)  # (B,S,S)

    kernel = functools.partial(_mha_kernel, n_heads=h, d_k=d_k)
    vmem = pl.BlockSpec(memory_space=pltpu.MemorySpace.VMEM)

    out2d, aw_flat = pl.pallas_call(
        kernel,
        in_specs=[vmem] * 6,
        out_specs=(vmem, vmem),
        out_shape=(
            jax.ShapeDtypeStruct((B * S, D), jnp.float32),
            jax.ShapeDtypeStruct((B, h * S), jnp.float32),
        ),
    )(x_cat, neg_mask, w_qkv, b_qkv, wo_t, bo)

    return out2d.reshape(B, S, D), aw_flat.reshape(B, h, S)


def _init_params(key):
    # nn.Linear weights are (out, in); _reset_parameters uses xavier_normal_
    # (std = sqrt(2 / (fan_in + fan_out))); biases keep the default
    # uniform(-1/sqrt(fan_in), 1/sqrt(fan_in)) init.
    keys = jax.random.split(key, 8)
    std = math.sqrt(2.0 / (D_MODEL + D_MODEL))
    bound = 1.0 / math.sqrt(D_MODEL)
    params = []
    for i in range(4):
        w = std * jax.random.normal(keys[2 * i], (D_MODEL, D_MODEL), jnp.float32)
        b = jax.random.uniform(keys[2 * i + 1], (1, D_MODEL), jnp.float32,
                               minval=-bound, maxval=bound)
        params += [w, b]
    return tuple(params)


def _reference(query, key, value, mask, params):
    # Pure-JAX reference reproducing the PyTorch forward (eval mode).
    wq, bq, wk, bk, wv, bv, wo, bo = params
    B, S, D = query.shape

    def proj(x, w, b):
        y = x @ w.T + b[0]
        return y.reshape(B, S, N_HEADS, D_K).transpose(0, 2, 1, 3)  # (B,H,S,dk)

    q = proj(query, wq, bq)
    k = proj(key, wk, bk)
    v = proj(value, wv, bv)
    scores = jnp.einsum("bhqd,bhkd->bhqk", q, k) / math.sqrt(D_K)
    scores = jnp.where(mask == 0, -1000000000.0, scores)
    p = jax.nn.softmax(scores, axis=-1)
    out = jnp.einsum("bhqk,bhkd->bhqd", p, v)        # (B,H,S,dk)
    attn_weights = jnp.mean(out, axis=-1)            # (B,H,S)
    out = out.transpose(0, 2, 1, 3).reshape(B, S, D)
    out = out @ wo.T + bo[0]
    return out, attn_weights


if __name__ == "__main__":
    root = jax.random.PRNGKey(0)
    kq, kk, kv, kp = jax.random.split(root, 4)

    query = jax.random.normal(kq, (BATCH, SEQ, D_MODEL), jnp.float32)
    key = jax.random.normal(kk, (BATCH, SEQ, D_MODEL), jnp.float32)
    value = jax.random.normal(kv, (BATCH, SEQ, D_MODEL), jnp.float32)
    # causal mask, shape (B, 1, S, S), 1 = keep / 0 = masked
    mask = jnp.broadcast_to(
        jnp.tril(jnp.ones((SEQ, SEQ), jnp.float32))[None, None],
        (BATCH, 1, SEQ, SEQ))

    params = _init_params(kp)

    out, attn_w = mha_forward(query, key, value, mask, params)
    out = jax.block_until_ready(out)
    attn_w = jax.block_until_ready(attn_w)

    ref_out, ref_w = _reference(query, key, value, mask, params)
    assert out.shape == (BATCH, SEQ, D_MODEL)
    assert attn_w.shape == (BATCH, N_HEADS, SEQ)
    assert jnp.allclose(out, ref_out, atol=1e-4, rtol=1e-4)
    assert jnp.allclose(attn_w, ref_w, atol=1e-4, rtol=1e-4)

    print("KERNEL_OK")
</pallas_src>

<mosaic_0001>
module attributes {stable_mosaic.version = 11 : i64} {
  func.func @_mha_kernel(%arg0: memref<2x8x96xf32, #tpu.memory_space<vmem>>, %arg1: memref<2x8x8xf32, #tpu.memory_space<vmem>>, %arg2: memref<96x96xf32, #tpu.memory_space<vmem>>, %arg3: memref<1x96xf32, #tpu.memory_space<vmem>>, %arg4: memref<32x32xf32, #tpu.memory_space<vmem>>, %arg5: memref<1x32xf32, #tpu.memory_space<vmem>>, %arg6: memref<16x32xf32, #tpu.memory_space<vmem>>, %arg7: memref<2x32xf32, #tpu.memory_space<vmem>>) attributes {dimension_semantics = [], scalar_prefetch = 0 : i64, scratch_operands = 0 : i64, tpu.core_type = #tpu.core_type<tc>} {
    %c0 = arith.constant 0 : index
    %c0_0 = arith.constant 0 : index
    %c0_1 = arith.constant 0 : index
    %0 = vector.load %arg0[%c0, %c0_0, %c0_1] : memref<2x8x96xf32, #tpu.memory_space<vmem>>, vector<2x8x96xf32>
    %1 = vector.shape_cast %0 : vector<2x8x96xf32> to vector<16x96xf32>
    %c0_2 = arith.constant 0 : index
    %c0_3 = arith.constant 0 : index
    %2 = vector.load %arg2[%c0_2, %c0_3] : memref<96x96xf32, #tpu.memory_space<vmem>>, vector<96x96xf32>
    %cst = arith.constant dense<0.000000e+00> : vector<16x96xf32>
    %3 = tpu.matmul %1, %2, %cst {dimension_numbers = #tpu.dot_dimension_numbers<[1], [0], [0], [1], [0, 0, 1, 1], [], []>} : vector<16x96xf32>, vector<96x96xf32>, vector<16x96xf32> -> vector<16x96xf32>
    %c0_4 = arith.constant 0 : index
    %c0_5 = arith.constant 0 : index
    %4 = vector.load %arg3[%c0_4, %c0_5] : memref<1x96xf32, #tpu.memory_space<vmem>>, vector<1x96xf32>
    %5 = vector.broadcast %4 : vector<1x96xf32> to vector<16x96xf32>
    %6 = arith.addf %3, %5 : vector<16x96xf32>
    %7 = vector.shape_cast %6 : vector<16x96xf32> to vector<2x8x96xf32>
    %c0_6 = arith.constant 0 : index
    %c0_7 = arith.constant 0 : index
    %c0_8 = arith.constant 0 : index
    %8 = vector.load %arg1[%c0_6, %c0_7, %c0_8] : memref<2x8x8xf32, #tpu.memory_space<vmem>>, vector<2x8x8xf32>
    %c0_9 = arith.constant 0 : index
    %c0_10 = arith.constant 0 : index
    %9 = vector.load %arg4[%c0_9, %c0_10] : memref<32x32xf32, #tpu.memory_space<vmem>>, vector<32x32xf32>
    %cst_11 = arith.constant 0.000000e+00 : f32
    %10 = vector.broadcast %cst_11 : f32 to vector<16x32xf32>
    %11 = vector.extract_strided_slice %7 {offsets = [0, 0, 0], sizes = [2, 8, 8], strides = [1, 1, 1]} : vector<2x8x96xf32> to vector<2x8x8xf32>
    %12 = vector.extract_strided_slice %7 {offsets = [0, 0, 32], sizes = [2, 8, 8], strides = [1, 1, 1]} : vector<2x8x96xf32> to vector<2x8x8xf32>
    %13 = vector.extract_strided_slice %7 {offsets = [0, 0, 64], sizes = [2, 8, 8], strides = [1, 1, 1]} : vector<2x8x96xf32> to vector<2x8x8xf32>
    "tpu.trace_start"() <{level = 10 : i32, message = "bqd,bkd->bqk"}> : () -> ()
    %cst_12 = arith.constant dense<0.000000e+00> : vector<2x8x8xf32>
    %14 = tpu.matmul %11, %12, %cst_12 {dimension_numbers = #tpu.dot_dimension_numbers<[2], [2], [1], [1], [0, 0, 0, 1, 1, 1], [0], [0]>} : vector<2x8x8xf32>, vector<2x8x8xf32>, vector<2x8x8xf32> -> vector<2x8x8xf32>
    "tpu.trace_stop"() : () -> ()
    %cst_13 = arith.constant 0.353553385 : f32
    %15 = vector.broadcast %cst_13 : f32 to vector<2x8x8xf32>
    %16 = arith.mulf %14, %15 : vector<2x8x8xf32>
    %17 = arith.addf %16, %8 : vector<2x8x8xf32>
    %cst_14 = arith.constant dense<0xFF800000> : vector<2x8xf32>
    %18 = vector.multi_reduction <maximumf>, %17, %cst_14 [2] : vector<2x8x8xf32> to vector<2x8xf32>
    %19 = vector.shape_cast %18 : vector<2x8xf32> to vector<2x8x1xf32>
    %20 = vector.broadcast %19 : vector<2x8x1xf32> to vector<2x8x8xf32>
    %21 = arith.subf %17, %20 : vector<2x8x8xf32>
    %22 = math.exp %21 : vector<2x8x8xf32>
    %cst_15 = arith.constant dense<0.000000e+00> : vector<2x8xf32>
    %23 = vector.multi_reduction <add>, %22, %cst_15 [2] : vector<2x8x8xf32> to vector<2x8xf32>
    %24 = vector.shape_cast %23 : vector<2x8xf32> to vector<2x8x1xf32>
    %25 = tpu.reciprocal %24 : vector<2x8x1xf32> -> vector<2x8x1xf32>
    %26 = vector.broadcast %25 : vector<2x8x1xf32> to vector<2x8x8xf32>
    %27 = arith.mulf %22, %26 : vector<2x8x8xf32>
    "tpu.trace_start"() <{level = 10 : i32, message = "bqk,bkd->bqd"}> : () -> ()
    %cst_16 = arith.constant dense<0.000000e+00> : vector<2x8x8xf32>
    %28 = tpu.matmul %27, %13, %cst_16 {dimension_numbers = #tpu.dot_dimension_numbers<[2], [1], [1], [2], [0, 0, 0, 1, 1, 2], [0], [0]>} : vector<2x8x8xf32>, vector<2x8x8xf32>, vector<2x8x8xf32> -> vector<2x8x8xf32>
    "tpu.trace_stop"() : () -> ()
    %cst_17 = arith.constant dense<0.000000e+00> : vector<2x8xf32>
    %29 = vector.multi_reduction <add>, %28, %cst_17 [2] : vector<2x8x8xf32> to vector<2x8xf32>
    %cst_18 = arith.constant 8.000000e+00 : f32
    %30 = vector.broadcast %cst_18 : f32 to vector<2x8xf32>
    %31 = arith.divf %29, %30 : vector<2x8xf32>
    %32 = vector.shape_cast %28 : vector<2x8x8xf32> to vector<16x8xf32>
    %33 = vector.extract_strided_slice %9 {offsets = [0, 0], sizes = [8, 32], strides = [1, 1]} : vector<32x32xf32> to vector<8x32xf32>
    %cst_19 = arith.constant dense<0.000000e+00> : vector<16x32xf32>
    %34 = tpu.matmul %32, %33, %cst_19 {dimension_numbers = #tpu.dot_dimension_numbers<[1], [0], [0], [1], [0, 0, 1, 1], [], []>} : vector<16x8xf32>, vector<8x32xf32>, vector<16x32xf32> -> vector<16x32xf32>
    %35 = arith.addf %10, %34 : vector<16x32xf32>
    %36 = vector.extract_strided_slice %7 {offsets = [0, 0, 8], sizes = [2, 8, 8], strides = [1, 1, 1]} : vector<2x8x96xf32> to vector<2x8x8xf32>
    %37 = vector.extract_strided_slice %7 {offsets = [0, 0, 40], sizes = [2, 8, 8], strides = [1, 1, 1]} : vector<2x8x96xf32> to vector<2x8x8xf32>
    %38 = vector.extract_strided_slice %7 {offsets = [0, 0, 72], sizes = [2, 8, 8], strides = [1, 1, 1]} : vector<2x8x96xf32> to vector<2x8x8xf32>
    "tpu.trace_start"() <{level = 10 : i32, message = "bqd,bkd->bqk"}> : () -> ()
    %cst_20 = arith.constant dense<0.000000e+00> : vector<2x8x8xf32>
    %39 = tpu.matmul %36, %37, %cst_20 {dimension_numbers = #tpu.dot_dimension_numbers<[2], [2], [1], [1], [0, 0, 0, 1, 1, 1], [0], [0]>} : vector<2x8x8xf32>, vector<2x8x8xf32>, vector<2x8x8xf32> -> vector<2x8x8xf32>
    "tpu.trace_stop"() : () -> ()
    %cst_21 = arith.constant 0.353553385 : f32
    %40 = vector.broadcast %cst_21 : f32 to vector<2x8x8xf32>
    %41 = arith.mulf %39, %40 : vector<2x8x8xf32>
    %42 = arith.addf %41, %8 : vector<2x8x8xf32>
    %cst_22 = arith.constant dense<0xFF800000> : vector<2x8xf32>
    %43 = vector.multi_reduction <maximumf>, %42, %cst_22 [2] : vector<2x8x8xf32> to vector<2x8xf32>
    %44 = vector.shape_cast %43 : vector<2x8xf32> to vector<2x8x1xf32>
    %45 = vector.broadcast %44 : vector<2x8x1xf32> to vector<2x8x8xf32>
    %46 = arith.subf %42, %45 : vector<2x8x8xf32>
    %47 = math.exp %46 : vector<2x8x8xf32>
    %cst_23 = arith.constant dense<0.000000e+00> : vector<2x8xf32>
    %48 = vector.multi_reduction <add>, %47, %cst_23 [2] : vector<2x8x8xf32> to vector<2x8xf32>
    %49 = vector.shape_cast %48 : vector<2x8xf32> to vector<2x8x1xf32>
    %50 = tpu.reciprocal %49 : vector<2x8x1xf32> -> vector<2x8x1xf32>
    %51 = vector.broadcast %50 : vector<2x8x1xf32> to vector<2x8x8xf32>
    %52 = arith.mulf %47, %51 : vector<2x8x8xf32>
    "tpu.trace_start"() <{level = 10 : i32, message = "bqk,bkd->bqd"}> : () -> ()
    %cst_24 = arith.constant dense<0.000000e+00> : vector<2x8x8xf32>
    %53 = tpu.matmul %52, %38, %cst_24 {dimension_numbers = #tpu.dot_dimension_numbers<[2], [1], [1], [2], [0, 0, 0, 1, 1, 2], [0], [0]>} : vector<2x8x8xf32>, vector<2x8x8xf32>, vector<2x8x8xf32> -> vector<2x8x8xf32>
    "tpu.trace_stop"() : () -> ()
    %cst_25 = arith.constant dense<0.000000e+00> : vector<2x8xf32>
    %54 = vector.multi_reduction <add>, %53, %cst_25 [2] : vector<2x8x8xf32> to vector<2x8xf32>
    %cst_26 = arith.constant 8.000000e+00 : f32
    %55 = vector.broadcast %cst_26 : f32 to vector<2x8xf32>
    %56 = arith.divf %54, %55 : vector<2x8xf32>
    %57 = vector.shape_cast %53 : vector<2x8x8xf32> to vector<16x8xf32>
    %58 = vector.extract_strided_slice %9 {offsets = [8, 0], sizes = [8, 32], strides = [1, 1]} : vector<32x32xf32> to vector<8x32xf32>
    %cst_27 = arith.constant dense<0.000000e+00> : vector<16x32xf32>
    %59 = tpu.matmul %57, %58, %cst_27 {dimension_numbers = #tpu.dot_dimension_numbers<[1], [0], [0], [1], [0, 0, 1, 1], [], []>} : vector<16x8xf32>, vector<8x32xf32>, vector<16x32xf32> -> vector<16x32xf32>
    %60 = arith.addf %35, %59 : vector<16x32xf32>
    %61 = vector.extract_strided_slice %7 {offsets = [0, 0, 16], sizes = [2, 8, 8], strides = [1, 1, 1]} : vector<2x8x96xf32> to vector<2x8x8xf32>
    %62 = vector.extract_strided_slice %7 {offsets = [0, 0, 48], sizes = [2, 8, 8], strides = [1, 1, 1]} : vector<2x8x96xf32> to vector<2x8x8xf32>
    %63 = vector.extract_strided_slice %7 {offsets = [0, 0, 80], sizes = [2, 8, 8], strides = [1, 1, 1]} : vector<2x8x96xf32> to vector<2x8x8xf32>
    "tpu.trace_start"() <{level = 10 : i32, message = "bqd,bkd->bqk"}> : () -> ()
    %cst_28 = arith.constant dense<0.000000e+00> : vector<2x8x8xf32>
    %64 = tpu.matmul %61, %62, %cst_28 {dimension_numbers = #tpu.dot_dimension_numbers<[2], [2], [1], [1], [0, 0, 0, 1, 1, 1], [0], [0]>} : vector<2x8x8xf32>, vector<2x8x8xf32>, vector<2x8x8xf32> -> vector<2x8x8xf32>
    "tpu.trace_stop"() : () -> ()
    %cst_29 = arith.constant 0.353553385 : f32
    %65 = vector.broadcast %cst_29 : f32 to vector<2x8x8xf32>
    %66 = arith.mulf %64, %65 : vector<2x8x8xf32>
    %67 = arith.addf %66, %8 : vector<2x8x8xf32>
    %cst_30 = arith.constant dense<0xFF800000> : vector<2x8xf32>
    %68 = vector.multi_reduction <maximumf>, %67, %cst_30 [2] : vector<2x8x8xf32> to vector<2x8xf32>
    %69 = vector.shape_cast %68 : vector<2x8xf32> to vector<2x8x1xf32>
    %70 = vector.broadcast %69 : vector<2x8x1xf32> to vector<2x8x8xf32>
    %71 = arith.subf %67, %70 : vector<2x8x8xf32>
    %72 = math.exp %71 : vector<2x8x8xf32>
    %cst_31 = arith.constant dense<0.000000e+00> : vector<2x8xf32>
    %73 = vector.multi_reduction <add>, %72, %cst_31 [2] : vector<2x8x8xf32> to vector<2x8xf32>
    %74 = vector.shape_cast %73 : vector<2x8xf32> to vector<2x8x1xf32>
    %75 = tpu.reciprocal %74 : vector<2x8x1xf32> -> vector<2x8x1xf32>
    %76 = vector.broadcast %75 : vector<2x8x1xf32> to vector<2x8x8xf32>
    %77 = arith.mulf %72, %76 : vector<2x8x8xf32>
    "tpu.trace_start"() <{level = 10 : i32, message = "bqk,bkd->bqd"}> : () -> ()
    %cst_32 = arith.constant dense<0.000000e+00> : vector<2x8x8xf32>
    %78 = tpu.matmul %77, %63, %cst_32 {dimension_numbers = #tpu.dot_dimension_numbers<[2], [1], [1], [2], [0, 0, 0, 1, 1, 2], [0], [0]>} : vector<2x8x8xf32>, vector<2x8x8xf32>, vector<2x8x8xf32> -> vector<2x8x8xf32>
    "tpu.trace_stop"() : () -> ()
    %cst_33 = arith.constant dense<0.000000e+00> : vector<2x8xf32>
    %79 = vector.multi_reduction <add>, %78, %cst_33 [2] : vector<2x8x8xf32> to vector<2x8xf32>
    %cst_34 = arith.constant 8.000000e+00 : f32
    %80 = vector.broadcast %cst_34 : f32 to vector<2x8xf32>
    %81 = arith.divf %79, %80 : vector<2x8xf32>
    %82 = vector.shape_cast %78 : vector<2x8x8xf32> to vector<16x8xf32>
    %83 = vector.extract_strided_slice %9 {offsets = [16, 0], sizes = [8, 32], strides = [1, 1]} : vector<32x32xf32> to vector<8x32xf32>
    %cst_35 = arith.constant dense<0.000000e+00> : vector<16x32xf32>
    %84 = tpu.matmul %82, %83, %cst_35 {dimension_numbers = #tpu.dot_dimension_numbers<[1], [0], [0], [1], [0, 0, 1, 1], [], []>} : vector<16x8xf32>, vector<8x32xf32>, vector<16x32xf32> -> vector<16x32xf32>
    %85 = arith.addf %60, %84 : vector<16x32xf32>
    %86 = vector.extract_strided_slice %7 {offsets = [0, 0, 24], sizes = [2, 8, 8], strides = [1, 1, 1]} : vector<2x8x96xf32> to vector<2x8x8xf32>
    %87 = vector.extract_strided_slice %7 {offsets = [0, 0, 56], sizes = [2, 8, 8], strides = [1, 1, 1]} : vector<2x8x96xf32> to vector<2x8x8xf32>
    %88 = vector.extract_strided_slice %7 {offsets = [0, 0, 88], sizes = [2, 8, 8], strides = [1, 1, 1]} : vector<2x8x96xf32> to vector<2x8x8xf32>
    "tpu.trace_start"() <{level = 10 : i32, message = "bqd,bkd->bqk"}> : () -> ()
    %cst_36 = arith.constant dense<0.000000e+00> : vector<2x8x8xf32>
    %89 = tpu.matmul %86, %87, %cst_36 {dimension_numbers = #tpu.dot_dimension_numbers<[2], [2], [1], [1], [0, 0, 0, 1, 1, 1], [0], [0]>} : vector<2x8x8xf32>, vector<2x8x8xf32>, vector<2x8x8xf32> -> vector<2x8x8xf32>
    "tpu.trace_stop"() : () -> ()
    %cst_37 = arith.constant 0.353553385 : f32
    %90 = vector.broadcast %cst_37 : f32 to vector<2x8x8xf32>
    %91 = arith.mulf %89, %90 : vector<2x8x8xf32>
    %92 = arith.addf %91, %8 : vector<2x8x8xf32>
    %cst_38 = arith.constant dense<0xFF800000> : vector<2x8xf32>
    %93 = vector.multi_reduction <maximumf>, %92, %cst_38 [2] : vector<2x8x8xf32> to vector<2x8xf32>
    %94 = vector.shape_cast %93 : vector<2x8xf32> to vector<2x8x1xf32>
    %95 = vector.broadcast %94 : vector<2x8x1xf32> to vector<2x8x8xf32>
    %96 = arith.subf %92, %95 : vector<2x8x8xf32>
    %97 = math.exp %96 : vector<2x8x8xf32>
    %cst_39 = arith.constant dense<0.000000e+00> : vector<2x8xf32>
    %98 = vector.multi_reduction <add>, %97, %cst_39 [2] : vector<2x8x8xf32> to vector<2x8xf32>
    %99 = vector.shape_cast %98 : vector<2x8xf32> to vector<2x8x1xf32>
    %100 = tpu.reciprocal %99 : vector<2x8x1xf32> -> vector<2x8x1xf32>
    %101 = vector.broadcast %100 : vector<2x8x1xf32> to vector<2x8x8xf32>
    %102 = arith.mulf %97, %101 : vector<2x8x8xf32>
    "tpu.trace_start"() <{level = 10 : i32, message = "bqk,bkd->bqd"}> : () -> ()
    %cst_40 = arith.constant dense<0.000000e+00> : vector<2x8x8xf32>
    %103 = tpu.matmul %102, %88, %cst_40 {dimension_numbers = #tpu.dot_dimension_numbers<[2], [1], [1], [2], [0, 0, 0, 1, 1, 2], [0], [0]>} : vector<2x8x8xf32>, vector<2x8x8xf32>, vector<2x8x8xf32> -> vector<2x8x8xf32>
    "tpu.trace_stop"() : () -> ()
    %cst_41 = arith.constant dense<0.000000e+00> : vector<2x8xf32>
    %104 = vector.multi_reduction <add>, %103, %cst_41 [2] : vector<2x8x8xf32> to vector<2x8xf32>
    %cst_42 = arith.constant 8.000000e+00 : f32
    %105 = vector.broadcast %cst_42 : f32 to vector<2x8xf32>
    %106 = arith.divf %104, %105 : vector<2x8xf32>
    %107 = vector.shape_cast %103 : vector<2x8x8xf32> to vector<16x8xf32>
    %108 = vector.extract_strided_slice %9 {offsets = [24, 0], sizes = [8, 32], strides = [1, 1]} : vector<32x32xf32> to vector<8x32xf32>
    %cst_43 = arith.constant dense<0.000000e+00> : vector<16x32xf32>
    %109 = tpu.matmul %107, %108, %cst_43 {dimension_numbers = #tpu.dot_dimension_numbers<[1], [0], [0], [1], [0, 0, 1, 1], [], []>} : vector<16x8xf32>, vector<8x32xf32>, vector<16x32xf32> -> vector<16x32xf32>
    %110 = arith.addf %85, %109 : vector<16x32xf32>
    %c0_44 = arith.constant 0 : index
    %c0_45 = arith.constant 0 : index
    %111 = vector.load %arg5[%c0_44, %c0_45] : memref<1x32xf32, #tpu.memory_space<vmem>>, vector<1x32xf32>
    %112 = vector.broadcast %111 : vector<1x32xf32> to vector<16x32xf32>
    %113 = arith.addf %110, %112 : vector<16x32xf32>
    %c0_46 = arith.constant 0 : index
    %c0_47 = arith.constant 0 : index
    %114 = vector.load %arg6[%c0_46, %c0_47] : memref<16x32xf32, #tpu.memory_space<vmem>>, vector<16x32xf32>
    tpu.vector_store %arg6[%c0_46, %c0_47], %113 {strides = array<i32>} : memref<16x32xf32, #tpu.memory_space<vmem>>, vector<16x32xf32>,
    %115 = tpu.concatenate %31, %56, %81, %106 in 1 : vector<2x8xf32>, vector<2x8xf32>, vector<2x8xf32>, vector<2x8xf32> -> vector<2x32xf32>
    %c0_48 = arith.constant 0 : index
    %c0_49 = arith.constant 0 : index
    %116 = vector.load %arg7[%c0_48, %c0_49] : memref<2x32xf32, #tpu.memory_space<vmem>>, vector<2x32xf32>
    tpu.vector_store %arg7[%c0_48, %c0_49], %115 {strides = array<i32>} : memref<2x32xf32, #tpu.memory_space<vmem>>, vector<2x32xf32>,
    return
  }
}

</mosaic_0001>

<llo_original>
// kernel: tpu_custom_call.1
$region0: #{tpu_custom_call.1}
  #allocation0 [shape = 'u32[]', space=smem, size = 0x4, offset = 0x4, fixed_abs, tag = 'smem constant byte address 0x4 - core index']
  #allocation1 [shape = 'u32[144,128]{1,0:T(1,128)}', space=vmem, size = 0x12000, scoped, tag = 'internal scratch']
  %s0 = inlined_call_operand.hbm [shape: f32[2,8,96], index: 0, kind: input, shape index: {}]
  %s1 = inlined_call_operand.hbm [shape: f32[2,8,8], index: 1, kind: input, shape index: {}]
  %s2 = inlined_call_operand.hbm [shape: f32[96,96], index: 2, kind: input, shape index: {}]
  %s3 = inlined_call_operand.vmem [shape: f32[1,96], index: 3, kind: input, shape index: {}]
  %s4 = inlined_call_operand.hbm [shape: f32[32,32], index: 4, kind: input, shape index: {}]
  %s5 = inlined_call_operand.vmem [shape: f32[1,32], index: 5, kind: input, shape index: {}]
  %s6 = inlined_call_operand.hbm [shape: f32[16,32], index: 6, kind: output, shape index: {0}]
  %s7 = inlined_call_operand.hbm [shape: f32[2,32], index: 7, kind: output, shape index: {1}]
  %8 = xla_tuple %s6, %s7
  %s9 = sld [smem:[#allocation0]]
  $region58: #{tpu_custom_call.1} parent=0
    _
  %s11 = ssub.s32 1, %s9
  %s12 = scalar_select 0, %s11, %s9
  $region1: #{tpu_custom_call.1} parent=0
    #allocation2 [shape = 'u8[8192]{0}', space=vmem, size = 0x2000, scoped, tag = 'input window, operand 0, single buffered']
    #allocation3 [shape = 's32[1]{0}', space=sflag, size = 0x4, scoped, tag = 'scoped memory for tpu_custom_call.1']
    #allocation4 [shape = 's32[1]{0}', space=sflag, size = 0x4, scoped, tag = 'scoped memory for tpu_custom_call.1']
    #allocation5 [shape = 'u8[8192]{0}', space=vmem, size = 0x2000, scoped, tag = 'input window, operand 1, single buffered']
    #allocation6 [shape = 's32[1]{0}', space=sflag, size = 0x4, scoped, tag = 'scoped memory for tpu_custom_call.1']
    #allocation7 [shape = 'u8[49152]{0}', space=vmem, size = 0xc000, scoped, tag = 'input window, operand 2, single buffered']
    #allocation8 [shape = 'u8[16384]{0}', space=vmem, size = 0x4000, scoped, tag = 'input window, operand 4, single buffered']
    #allocation9 [shape = 's32[1]{0}', space=sflag, size = 0x4, scoped, tag = 'scoped memory for tpu_custom_call.1']
    #allocation10 [shape = 'u8[8192]{0}', space=vmem, size = 0x2000, scoped, tag = 'output window, operand 0, single buffered']
    #allocation11 [shape = 'u8[1024]{0}', space=vmem, size = 0x400, scoped, tag = 'output window, operand 1, single buffered']
    #allocation12 [shape = 's32[1]{0}', space=sflag, size = 0x4, scoped, tag = 'scoped memory for tpu_custom_call.1']
    %13 = vsyncpa [#allocation3], 0
    %14 = vsyncpa [#allocation6], 0
    %15 = vsyncpa [#allocation9], 0
    %16 = vsyncpa [#allocation4], 0
    %17 = vsyncpa [#allocation12], 0
    // Predicated region
    $region2: #{tpu_custom_call.1} parent=1 // pred_check
      _
    $region3: #{tpu_custom_call.1} parent=1 // pred_check_branch
      %19 = sbr.rel (0) target = $region5
    $region4: #{tpu_custom_call.1} parent=1 // pred_region
      %s21 = ssub.s32 256, 256
      %22 = vsyncadd [#allocation3], %s21
      %s23 = sshll.u32 [#allocation2], 4
      %s24 = int_to_ptr.vmem [resolvable:$true] %s23
      %29 = dma.hbm_to_vmem [thread:$0]  %s0, 256, %s24, [#allocation3], 128, 128, 8
    $region5: #{tpu_custom_call.1} parent=1 // pred_fallthru
      _
    // Predicated region
    $region6: #{tpu_custom_call.1} parent=1 // pred_check
      _
    $region7: #{tpu_custom_call.1} parent=1 // pred_check_branch
      %31 = sbr.rel (0) target = $region9
    $region8: #{tpu_custom_call.1} parent=1 // pred_region
      %s33 = ssub.s32 256, 256
      %34 = vsyncadd [#allocation6], %s33
      %s35 = sshll.u32 [#allocation5], 4
      %s36 = int_to_ptr.vmem [resolvable:$true] %s35
      %41 = dma.hbm_to_vmem [thread:$0]  %s1, 256, %s36, [#allocation6], 128, 128, 8
    $region9: #{tpu_custom_call.1} parent=1 // pred_fallthru
      _
    // Predicated region
    $region10: #{tpu_custom_call.1} parent=1 // pred_check
      _
    $region11: #{tpu_custom_call.1} parent=1 // pred_check_branch
      %43 = sbr.rel (0) target = $region13
    $region12: #{tpu_custom_call.1} parent=1 // pred_region
      %s45 = ssub.s32 1536, 1536
      %46 = vsyncadd [#allocation6], %s45
      %s47 = sshll.u32 [#allocation7], 4
      %s48 = int_to_ptr.vmem [resolvable:$true] %s47
      %53 = dma.hbm_to_vmem [thread:$0]  %s2, 1536, %s48, [#allocation6], 128, 128, 8
    $region13: #{tpu_custom_call.1} parent=1 // pred_fallthru
      _
    // Predicated region
    $region14: #{tpu_custom_call.1} parent=1 // pred_check
      _
    $region15: #{tpu_custom_call.1} parent=1 // pred_check_branch
      %55 = sbr.rel (0) target = $region17
    $region16: #{tpu_custom_call.1} parent=1 // pred_region
      _
    $region17: #{tpu_custom_call.1} parent=1 // pred_fallthru
      _
    // Predicated region
    $region18: #{tpu_custom_call.1} parent=1 // pred_check
      _
    $region19: #{tpu_custom_call.1} parent=1 // pred_check_branch
      %57 = sbr.rel (0) target = $region21
    $region20: #{tpu_custom_call.1} parent=1 // pred_region
      %s59 = ssub.s32 512, 512
      %60 = vsyncadd [#allocation9], %s59
      %s61 = sshll.u32 [#allocation8], 4
      %s62 = int_to_ptr.vmem [resolvable:$true] %s61
      %67 = dma.hbm_to_vmem [thread:$0]  %s4, 512, %s62, [#allocation9], 128, 128, 8
    $region21: #{tpu_custom_call.1} parent=1 // pred_fallthru
      _
    // Predicated region
    $region22: #{tpu_custom_call.1} parent=1 // pred_check
      _
    $region23: #{tpu_custom_call.1} parent=1 // pred_check_branch
      %69 = sbr.rel (0) target = $region25
    $region24: #{tpu_custom_call.1} parent=1 // pred_region
      _
    $region25: #{tpu_custom_call.1} parent=1 // pred_fallthru
      _
    // Predicated region
    $region26: #{tpu_custom_call.1} parent=1 // pred_check
      _
    $region27: #{tpu_custom_call.1} parent=1 // pred_check_branch
      %71 = sbr.rel (0) target = $region29
    $region28: #{tpu_custom_call.1} parent=1 // pred_region
      %72 = dma.done [#allocation3], 256
    $region29: #{tpu_custom_call.1} parent=1 // pred_fallthru
      _
    // Predicated region
    $region30: #{tpu_custom_call.1} parent=1 // pred_check
      _
    $region31: #{tpu_custom_call.1} parent=1 // pred_check_branch
      %74 = sbr.rel (0) target = $region33
    $region32: #{tpu_custom_call.1} parent=1 // pred_region
      %75 = dma.done [#allocation6], 256
    $region33: #{tpu_custom_call.1} parent=1 // pred_fallthru
      _
    // Predicated region
    $region34: #{tpu_custom_call.1} parent=1 // pred_check
      _
    $region35: #{tpu_custom_call.1} parent=1 // pred_check_branch
      %77 = sbr.rel (0) target = $region37
    $region36: #{tpu_custom_call.1} parent=1 // pred_region
      %78 = dma.done [#allocation6], 1536
    $region37: #{tpu_custom_call.1} parent=1 // pred_fallthru
      _
    // Predicated region
    $region38: #{tpu_custom_call.1} parent=1 // pred_check
      _
    $region39: #{tpu_custom_call.1} parent=1 // pred_check_branch
      %80 = sbr.rel (0) target = $region41
    $region40: #{tpu_custom_call.1} parent=1 // pred_region
      %81 = dma.done [#allocation9], 512
    $region41: #{tpu_custom_call.1} parent=1 // pred_fallthru
      _
    %v82 = vld [vmem:[#allocation2] sm:$0xff]
    %v83 = vld [vmem:[#allocation2 + $0x8] sm:$0xff]
    %v84 = vld [vmem:[#allocation7] sm:$0xff]
    %v85 = vld [vmem:[#allocation7 + $0x8] sm:$0xff]
    %v86 = vld [vmem:[#allocation7 + $0x10] sm:$0xff]
    %v87 = vld [vmem:[#allocation7 + $0x18] sm:$0xff]
    %v88 = vld [vmem:[#allocation7 + $0x20] sm:$0xff]
    %v89 = vld [vmem:[#allocation7 + $0x28] sm:$0xff]
    %v90 = vld [vmem:[#allocation7 + $0x30] sm:$0xff]
    %v91 = vld [vmem:[#allocation7 + $0x38] sm:$0xff]
    %v92 = vld [vmem:[#allocation7 + $0x40] sm:$0xff]
    %v93 = vld [vmem:[#allocation7 + $0x48] sm:$0xff]
    %v94 = vld [vmem:[#allocation7 + $0x50] sm:$0xff]
    %v95 = vld [vmem:[#allocation7 + $0x58] sm:$0xff]
    %v96 = vld [vmem:[%s3] sm:$0x1]
    %v98 = vlaneseq
    %v99 = vshrl.u32 %v98, 7
    %v100 = vsub.s32 0, %v99
    %v101 = vrot.slane %v96, %v100
    %vm103 = vcmask 785408
    %v105 = vsel %vm103, %v82, 0
    %v108 = vsel %vm103, %v83, 0
    %110 = vmatprep.subr.mxu0 0.0
    %111 = vmatpush1.msra.mxu0 %v84
    %112 = vmatprep.subr.mxu0 0.0
    %113 = vmatpush1.msra.mxu0 %v85
    %114 = vmatprep.subr.mxu0 0.0
    %115 = vmatpush1.msra.mxu0 %v86
    %116 = vmatprep.subr.mxu0 0.0
    %117 = vmatpush1.msra.mxu0 %v87
    %118 = vmatprep.subr.mxu0 0.0
    %119 = vmatpush1.msra.mxu0 %v88
    %120 = vmatprep.subr.mxu0 0.0
    %121 = vmatpush1.msra.mxu0 %v89
    %122 = vmatprep.subr.mxu0 0.0
    %123 = vmatpush1.msra.mxu0 %v90
    %124 = vmatprep.subr.mxu0 0.0
    %125 = vmatpush1.msra.mxu0 %v91
    %126 = vmatprep.subr.mxu0 0.0
    %127 = vmatpush1.msra.mxu0 %v92
    %128 = vmatprep.subr.mxu0 0.0
    %129 = vmatpush1.msra.mxu0 %v93
    %130 = vmatprep.subr.mxu0 0.0
    %131 = vmatpush1.msra.mxu0 %v94
    %132 = vmatprep.subr.mxu0 0.0
    %133 = vmatpush1.msra.mxu0 %v95
    %134 = vmatprep.subr.mxu0 0.0
    %135 = vmatpush1.msra.mxu0 0.0
    %136 = vmatprep.subr.mxu0 0.0
    %137 = vmatpush1.msra.mxu0 0.0
    %138 = vmatprep.subr.mxu0 0.0
    %139 = vmatpush1.msra.mxu0 0.0
    %140 = vmatprep.subr.mxu0 0.0
    %141 = vmatpush1.msra.mxu0 0.0
    %142 = vmatprep.subr.mxu0 0.0
    %143 = vmatpush1.msra.mxu0 0.0
    %144 = vmatprep.subr.mxu0 0.0
    %145 = vmatpush1.msra.mxu0 0.0
    %146 = vmatprep.subr.mxu0 0.0
    %147 = vmatpush1.msra.mxu0 0.0
    %148 = vmatprep.subr.mxu0 0.0
    %149 = vmatpush1.msra.mxu0 0.0
    %150 = vmatprep.subr.mxu0 0.0
    %151 = vmatpush1.msra.mxu0 0.0
    %152 = vmatprep.subr.mxu0 0.0
    %153 = vmatpush1.msra.mxu0 0.0
    %154 = vmatprep.subr.mxu0 0.0
    %155 = vmatpush1.msra.mxu0 0.0
    %156 = vmatprep.subr.mxu0 0.0
    %157 = vmatpush1.msra.mxu0 0.0
    %158 = vmatprep.subr.mxu0 0.0
    %159 = vmatpush1.msra.mxu0 0.0
    %160 = vmatprep.subr.mxu0 0.0
    %161 = vmatpush1.msra.mxu0 0.0
    %162 = vmatprep.subr.mxu0 0.0
    %163 = vmatpush1.msra.mxu0 0.0
    %164 = vmatprep.subr.mxu0 0.0
    %165 = vmatpush1.msra.mxu0 0.0
    %166 = vmatprep.subr.mxu0 0.0
    %167 = vmatpush1.msra.mxu0 0.0
    %168 = vmatprep.subr.mxu0 0.0
    %169 = vmatpush1.msra.mxu0 0.0
    %170 = vmatprep.subr.mxu0 0.0
    %171 = vmatpush1.msra.mxu0 0.0
    %172 = vmatprep.subr.mxu0 0.0
    %173 = vmatpush1.msra.mxu0 0.0
    %174 = vmatprep.mubr.f32.mxu0 0.0
    %175 = vmatmul.mubr.f32.gmra.mrb[0].mxu0 %v105
    %v176 = vpop.f32.mrb[0].mxu0
    %v177 = vadd.f32 %v101, %v176
    %v178 = vpop.f32.mrb[0].mxu0
    %179 = vmatprep.mubr.f32.mxu0 0.0
    %180 = vmatmul.mubr.f32.gmra.mrb[0].mxu0 %v108
    %v181 = vpop.f32.mrb[0].mxu0
    %v182 = vadd.f32 %v101, %v181
    %v183 = vpop.f32.mrb[0].mxu0
    %184 = vdwg.mxu0
    %v185 = vld [vmem:[#allocation5] sm:$0xff]
    %v186 = vld [vmem:[#allocation5 + $0x8] sm:$0xff]
    %v187 = vld [vmem:[#allocation8] sm:$0xff]
    %v188 = vld [vmem:[#allocation8 + $0x8] sm:$0xff]
    %v189 = vld [vmem:[#allocation8 + $0x10] sm:$0xff]
    %v190 = vld [vmem:[#allocation8 + $0x18] sm:$0xff]
    %192 = vrot.lane.b32.xlu0 %v177, 96
    %v193 = vpop.permute.xlu0 %192
    %vm194 = vcmask 64512
    %v195 = vsel %vm194, %v177, 0
    %v197 = vsel %vm194, %v193, 0
    %199 = vmatprep.subr.mxu0 0.0
    %200 = vmatpush1.xpose.msra.mxu0 %v197
    %201 = vmatprep.subr.mxu0 0.0
    %202 = vmatpush1.xpose.msra.mxu0 0.0
    %203 = vmatprep.subr.mxu0 0.0
    %204 = vmatpush1.xpose.msra.mxu0 0.0
    %205 = vmatprep.subr.mxu0 0.0
    %206 = vmatpush1.xpose.msra.mxu0 0.0
    %207 = vmatprep.subr.mxu0 0.0
    %208 = vmatpush1.xpose.msra.mxu0 0.0
    %209 = vmatprep.subr.mxu0 0.0
    %210 = vmatpush1.xpose.msra.mxu0 0.0
    %211 = vmatprep.subr.mxu0 0.0
    %212 = vmatpush1.xpose.msra.mxu0 0.0
    %213 = vmatprep.subr.mxu0 0.0
    %214 = vmatpush1.xpose.msra.mxu0 0.0
    %215 = vmatprep.subr.mxu0 0.0
    %216 = vmatpush1.xpose.msra.mxu0 0.0
    %217 = vmatprep.subr.mxu0 0.0
    %218 = vmatpush1.xpose.msra.mxu0 0.0
    %219 = vmatprep.subr.mxu0 0.0
    %220 = vmatpush1.xpose.msra.mxu0 0.0
    %221 = vmatprep.subr.mxu0 0.0
    %222 = vmatpush1.xpose.msra.mxu0 0.0
    %223 = vmatprep.subr.mxu0 0.0
    %224 = vmatpush1.xpose.msra.mxu0 0.0
    %225 = vmatprep.subr.mxu0 0.0
    %226 = vmatpush1.xpose.msra.mxu0 0.0
    %227 = vmatprep.subr.mxu0 0.0
    %228 = vmatpush1.xpose.msra.mxu0 0.0
    %229 = vmatprep.subr.mxu0 0.0
    %230 = vmatpush1.xpose.msra.mxu0 0.0
    %231 = vmatprep.subr.mxu0 0.0
    %232 = vmatpush1.xpose.msra.mxu0 0.0
    %233 = vmatprep.subr.mxu0 0.0
    %234 = vmatpush1.xpose.msra.mxu0 0.0
    %235 = vmatprep.subr.mxu0 0.0
    %236 = vmatpush1.xpose.msra.mxu0 0.0
    %237 = vmatprep.subr.mxu0 0.0
    %238 = vmatpush1.xpose.msra.mxu0 0.0
    %239 = vmatprep.subr.mxu0 0.0
    %240 = vmatpush1.xpose.msra.mxu0 0.0
    %241 = vmatprep.subr.mxu0 0.0
    %242 = vmatpush1.xpose.msra.mxu0 0.0
    %243 = vmatprep.subr.mxu0 0.0
    %244 = vmatpush1.xpose.msra.mxu0 0.0
    %245 = vmatprep.subr.mxu0 0.0
    %246 = vmatpush1.xpose.msra.mxu0 0.0
    %247 = vmatprep.subr.mxu0 0.0
    %248 = vmatpush1.xpose.msra.mxu0 0.0
    %249 = vmatprep.subr.mxu0 0.0
    %250 = vmatpush1.xpose.msra.mxu0 0.0
    %251 = vmatprep.subr.mxu0 0.0
    %252 = vmatpush1.xpose.msra.mxu0 0.0
    %253 = vmatprep.subr.mxu0 0.0
    %254 = vmatpush1.xpose.msra.mxu0 0.0
    %255 = vmatprep.subr.mxu0 0.0
    %256 = vmatpush1.xpose.msra.mxu0 0.0
    %257 = vmatprep.subr.mxu0 0.0
    %258 = vmatpush1.xpose.msra.mxu0 0.0
    %259 = vmatprep.subr.mxu0 0.0
    %260 = vmatpush1.xpose.msra.mxu0 0.0
    %261 = vmatprep.subr.mxu0 0.0
    %262 = vmatpush1.xpose.msra.mxu0 0.0
    %263 = vmatprep.mubr.f32.mxu0 0.0
    %264 = vmatmul.mubr.f32.gmra.mrb[0].mxu0 %v195
    %v265 = vpop.f32.mrb[0].mxu0
    %v266 = vadd.f32 0.0, %v265
    %v267 = vpop.f32.mrb[0].mxu0
    %268 = vdwg.mxu0
    %270 = vrot.lane.b32.xlu0 %v182, 96
    %v271 = vpop.permute.xlu0 %270
    %v272 = vsel %vm194, %v182, 0
    %v274 = vsel %vm194, %v271, 0
    %276 = vmatprep.subr.mxu0 0.0
    %277 = vmatpush1.xpose.msra.mxu0 %v274
    %278 = vmatprep.subr.mxu0 0.0
    %279 = vmatpush1.xpose.msra.mxu0 0.0
    %280 = vmatprep.subr.mxu0 0.0
    %281 = vmatpush1.xpose.msra.mxu0 0.0
    %282 = vmatprep.subr.mxu0 0.0
    %283 = vmatpush1.xpose.msra.mxu0 0.0
    %284 = vmatprep.subr.mxu0 0.0
    %285 = vmatpush1.xpose.msra.mxu0 0.0
    %286 = vmatprep.subr.mxu0 0.0
    %287 = vmatpush1.xpose.msra.mxu0 0.0
    %288 = vmatprep.subr.mxu0 0.0
    %289 = vmatpush1.xpose.msra.mxu0 0.0
    %290 = vmatprep.subr.mxu0 0.0
    %291 = vmatpush1.xpose.msra.mxu0 0.0
    %292 = vmatprep.subr.mxu0 0.0
    %293 = vmatpush1.xpose.msra.mxu0 0.0
    %294 = vmatprep.subr.mxu0 0.0
    %295 = vmatpush1.xpose.msra.mxu0 0.0
    %296 = vmatprep.subr.mxu0 0.0
    %297 = vmatpush1.xpose.msra.mxu0 0.0
    %298 = vmatprep.subr.mxu0 0.0
    %299 = vmatpush1.xpose.msra.mxu0 0.0
    %300 = vmatprep.subr.mxu0 0.0
    %301 = vmatpush1.xpose.msra.mxu0 0.0
    %302 = vmatprep.subr.mxu0 0.0
    %303 = vmatpush1.xpose.msra.mxu0 0.0
    %304 = vmatprep.subr.mxu0 0.0
    %305 = vmatpush1.xpose.msra.mxu0 0.0
    %306 = vmatprep.subr.mxu0 0.0
    %307 = vmatpush1.xpose.msra.mxu0 0.0
    %308 = vmatprep.subr.mxu0 0.0
    %309 = vmatpush1.xpose.msra.mxu0 0.0
    %310 = vmatprep.subr.mxu0 0.0
    %311 = vmatpush1.xpose.msra.mxu0 0.0
    %312 = vmatprep.subr.mxu0 0.0
    %313 = vmatpush1.xpose.msra.mxu0 0.0
    %314 = vmatprep.subr.mxu0 0.0
    %315 = vmatpush1.xpose.msra.mxu0 0.0
    %316 = vmatprep.subr.mxu0 0.0
    %317 = vmatpush1.xpose.msra.mxu0 0.0
    %318 = vmatprep.subr.mxu0 0.0
    %319 = vmatpush1.xpose.msra.mxu0 0.0
    %320 = vmatprep.subr.mxu0 0.0
    %321 = vmatpush1.xpose.msra.mxu0 0.0
    %322 = vmatprep.subr.mxu0 0.0
    %323 = vmatpush1.xpose.msra.mxu0 0.0
    %324 = vmatprep.subr.mxu0 0.0
    %325 = vmatpush1.xpose.msra.mxu0 0.0
    %326 = vmatprep.subr.mxu0 0.0
    %327 = vmatpush1.xpose.msra.mxu0 0.0
    %328 = vmatprep.subr.mxu0 0.0
    %329 = vmatpush1.xpose.msra.mxu0 0.0
    %330 = vmatprep.subr.mxu0 0.0
    %331 = vmatpush1.xpose.msra.mxu0 0.0
    %332 = vmatprep.subr.mxu0 0.0
    %333 = vmatpush1.xpose.msra.mxu0 0.0
    %334 = vmatprep.subr.mxu0 0.0
    %335 = vmatpush1.xpose.msra.mxu0 0.0
    %336 = vmatprep.subr.mxu0 0.0
    %337 = vmatpush1.xpose.msra.mxu0 0.0
    %338 = vmatprep.subr.mxu0 0.0
    %339 = vmatpush1.xpose.msra.mxu0 0.0
    %340 = vmatprep.mubr.f32.mxu0 0.0
    %341 = vmatmul.mubr.f32.gmra.mrb[0].mxu0 %v272
    %v342 = vpop.f32.mrb[0].mxu0
    %v343 = vadd.f32 0.0, %v342
    %v344 = vpop.f32.mrb[0].mxu0
    %345 = vdwg.mxu0
    %v346 = vmul.f32 %v266, 0.35355338
    %v347 = vmul.f32 %v343, 0.35355338
    %v348 = vadd.f32 %v346, %v185
    %v349 = vadd.f32 %v347, %v186
    %v350 = vsel %vm194, %v348, -inf
    %351 = vmax.xlane.f32.xlu0 %v350
    %v352 = vpop.xlane.xlu0 %351
    %v353 = vsel %vm194, %v349, -inf
    %354 = vmax.xlane.f32.xlu0 %v353
    %v355 = vpop.xlane.xlu0 %354
    %v356 = vsub.f32 %v348, %v352
    %v357 = vsub.f32 %v349, %v355
    %v358 = vmul.f32 %v356, 1.442695
    %v359 = vpow.pop %v358
    %v360 = vmul.f32 %v357, 1.442695
    %v361 = vpow.pop %v360
    %v362 = vsel %vm194, %v359, 0.0
    %363 = vadd.xlane.f32.xlu0 %v362
    %v364 = vpop.xlane.xlu0 %363
    %v365 = vsel %vm194, %v361, 0.0
    %366 = vadd.xlane.f32.xlu0 %v365
    %v367 = vpop.xlane.xlu0 %366
    %v368 = vrcp.pop %v364
    %v369 = vrcp.pop %v367
    %v370 = vmul.f32 %v359, %v368
    %v371 = vmul.f32 %v361, %v369
    %372 = vrot.lane.b32.xlu0 %v177, 64
    %v373 = vpop.permute.xlu0 %372
    %v376 = vsel %vm194, %v370, 0
    %378 = vmatprep.subr.mxu0 0.0
    %379 = vmatpush1.msra.mxu0 %v373
    %380 = vmatprep.subr.mxu0 0.0
    %381 = vmatpush1.msra.mxu0 0.0
    %382 = vmatprep.subr.mxu0 0.0
    %383 = vmatpush1.msra.mxu0 0.0
    %384 = vmatprep.subr.mxu0 0.0
    %385 = vmatpush1.msra.mxu0 0.0
    %386 = vmatprep.subr.mxu0 0.0
    %387 = vmatpush1.msra.mxu0 0.0
    %388 = vmatprep.subr.mxu0 0.0
    %389 = vmatpush1.msra.mxu0 0.0
    %390 = vmatprep.subr.mxu0 0.0
    %391 = vmatpush1.msra.mxu0 0.0
    %392 = vmatprep.subr.mxu0 0.0
    %393 = vmatpush1.msra.mxu0 0.0
    %394 = vmatprep.subr.mxu0 0.0
    %395 = vmatpush1.msra.mxu0 0.0
    %396 = vmatprep.subr.mxu0 0.0
    %397 = vmatpush1.msra.mxu0 0.0
    %398 = vmatprep.subr.mxu0 0.0
    %399 = vmatpush1.msra.mxu0 0.0
    %400 = vmatprep.subr.mxu0 0.0
    %401 = vmatpush1.msra.mxu0 0.0
    %402 = vmatprep.subr.mxu0 0.0
    %403 = vmatpush1.msra.mxu0 0.0
    %404 = vmatprep.subr.mxu0 0.0
    %405 = vmatpush1.msra.mxu0 0.0
    %406 = vmatprep.subr.mxu0 0.0
    %407 = vmatpush1.msra.mxu0 0.0
    %408 = vmatprep.subr.mxu0 0.0
    %409 = vmatpush1.msra.mxu0 0.0
    %410 = vmatprep.subr.mxu0 0.0
    %411 = vmatpush1.msra.mxu0 0.0
    %412 = vmatprep.subr.mxu0 0.0
    %413 = vmatpush1.msra.mxu0 0.0
    %414 = vmatprep.subr.mxu0 0.0
    %415 = vmatpush1.msra.mxu0 0.0
    %416 = vmatprep.subr.mxu0 0.0
    %417 = vmatpush1.msra.mxu0 0.0
    %418 = vmatprep.subr.mxu0 0.0
    %419 = vmatpush1.msra.mxu0 0.0
    %420 = vmatprep.subr.mxu0 0.0
    %421 = vmatpush1.msra.mxu0 0.0
    %422 = vmatprep.subr.mxu0 0.0
    %423 = vmatpush1.msra.mxu0 0.0
    %424 = vmatprep.subr.mxu0 0.0
    %425 = vmatpush1.msra.mxu0 0.0
    %426 = vmatprep.subr.mxu0 0.0
    %427 = vmatpush1.msra.mxu0 0.0
    %428 = vmatprep.subr.mxu0 0.0
    %429 = vmatpush1.msra.mxu0 0.0
    %430 = vmatprep.subr.mxu0 0.0
    %431 = vmatpush1.msra.mxu0 0.0
    %432 = vmatprep.subr.mxu0 0.0
    %433 = vmatpush1.msra.mxu0 0.0
    %434 = vmatprep.subr.mxu0 0.0
    %435 = vmatpush1.msra.mxu0 0.0
    %436 = vmatprep.subr.mxu0 0.0
    %437 = vmatpush1.msra.mxu0 0.0
    %438 = vmatprep.subr.mxu0 0.0
    %439 = vmatpush1.msra.mxu0 0.0
    %440 = vmatprep.subr.mxu0 0.0
    %441 = vmatpush1.msra.mxu0 0.0
    %442 = vmatprep.mubr.f32.mxu0 0.0
    %443 = vmatmul.mubr.f32.gmra.mrb[0].mxu0 %v376
    %v444 = vpop.f32.mrb[0].mxu0
    %v445 = vadd.f32 0.0, %v444
    %v446 = vpop.f32.mrb[0].mxu0
    %447 = vdwg.mxu0
    %448 = vrot.lane.b32.xlu0 %v182, 64
    %v449 = vpop.permute.xlu0 %448
    %v452 = vsel %vm194, %v371, 0
    %454 = vmatprep.subr.mxu0 0.0
    %455 = vmatpush1.msra.mxu0 %v449
    %456 = vmatprep.subr.mxu0 0.0
    %457 = vmatpush1.msra.mxu0 0.0
    %458 = vmatprep.subr.mxu0 0.0
    %459 = vmatpush1.msra.mxu0 0.0
    %460 = vmatprep.subr.mxu0 0.0
    %461 = vmatpush1.msra.mxu0 0.0
    %462 = vmatprep.subr.mxu0 0.0
    %463 = vmatpush1.msra.mxu0 0.0
    %464 = vmatprep.subr.mxu0 0.0
    %465 = vmatpush1.msra.mxu0 0.0
    %466 = vmatprep.subr.mxu0 0.0
    %467 = vmatpush1.msra.mxu0 0.0
    %468 = vmatprep.subr.mxu0 0.0
    %469 = vmatpush1.msra.mxu0 0.0
    %470 = vmatprep.subr.mxu0 0.0
    %471 = vmatpush1.msra.mxu0 0.0
    %472 = vmatprep.subr.mxu0 0.0
    %473 = vmatpush1.msra.mxu0 0.0
    %474 = vmatprep.subr.mxu0 0.0
    %475 = vmatpush1.msra.mxu0 0.0
    %476 = vmatprep.subr.mxu0 0.0
    %477 = vmatpush1.msra.mxu0 0.0
    %478 = vmatprep.subr.mxu0 0.0
    %479 = vmatpush1.msra.mxu0 0.0
    %480 = vmatprep.subr.mxu0 0.0
    %481 = vmatpush1.msra.mxu0 0.0
    %482 = vmatprep.subr.mxu0 0.0
    %483 = vmatpush1.msra.mxu0 0.0
    %484 = vmatprep.subr.mxu0 0.0
    %485 = vmatpush1.msra.mxu0 0.0
    %486 = vmatprep.subr.mxu0 0.0
    %487 = vmatpush1.msra.mxu0 0.0
    %488 = vmatprep.subr.mxu0 0.0
    %489 = vmatpush1.msra.mxu0 0.0
    %490 = vmatprep.subr.mxu0 0.0
    %491 = vmatpush1.msra.mxu0 0.0
    %492 = vmatprep.subr.mxu0 0.0
    %493 = vmatpush1.msra.mxu0 0.0
    %494 = vmatprep.subr.mxu0 0.0
    %495 = vmatpush1.msra.mxu0 0.0
    %496 = vmatprep.subr.mxu0 0.0
    %497 = vmatpush1.msra.mxu0 0.0
    %498 = vmatprep.subr.mxu0 0.0
    %499 = vmatpush1.msra.mxu0 0.0
    %500 = vmatprep.subr.mxu0 0.0
    %501 = vmatpush1.msra.mxu0 0.0
    %502 = vmatprep.subr.mxu0 0.0
    %503 = vmatpush1.msra.mxu0 0.0
    %504 = vmatprep.subr.mxu0 0.0
    %505 = vmatpush1.msra.mxu0 0.0
    %506 = vmatprep.subr.mxu0 0.0
    %507 = vmatpush1.msra.mxu0 0.0
    %508 = vmatprep.subr.mxu0 0.0
    %509 = vmatpush1.msra.mxu0 0.0
    %510 = vmatprep.subr.mxu0 0.0
    %511 = vmatpush1.msra.mxu0 0.0
    %512 = vmatprep.subr.mxu0 0.0
    %513 = vmatpush1.msra.mxu0 0.0
    %514 = vmatprep.subr.mxu0 0.0
    %515 = vmatpush1.msra.mxu0 0.0
    %516 = vmatprep.subr.mxu0 0.0
    %517 = vmatpush1.msra.mxu0 0.0
    %518 = vmatprep.mubr.f32.mxu0 0.0
    %519 = vmatmul.mubr.f32.gmra.mrb[0].mxu0 %v452
    %v520 = vpop.f32.mrb[0].mxu0
    %v521 = vadd.f32 0.0, %v520
    %v522 = vpop.f32.mrb[0].mxu0
    %523 = vdwg.mxu0
    %v524 = vsel %vm194, %v445, 0.0
    %525 = vadd.xlane.f32.xlu0 %v524
    %v526 = vpop.xlane.xlu0 %525
    %v527 = vsel %vm194, %v521, 0.0
    %528 = vadd.xlane.f32.xlu0 %v527
    %v529 = vpop.xlane.xlu0 %528
    %v530 = vrcp.pop 8.0
    %v531 = vmul.f32 %v526, %v530
    %v532 = vmul.f32 %v529, %v530
    %533 = vrot.lane.b32.xlu0 %v177, 120
    %v534 = vpop.permute.xlu0 %533
    %535 = vrot.lane.b32.xlu0 %v177, 88
    %v536 = vpop.permute.xlu0 %535
    %v537 = vsel %vm194, %v534, 0
    %v539 = vsel %vm194, %v536, 0
    %541 = vmatprep.subr.mxu0 0.0
    %542 = vmatpush1.xpose.msra.mxu0 %v539
    %543 = vmatprep.subr.mxu0 0.0
    %544 = vmatpush1.xpose.msra.mxu0 0.0
    %545 = vmatprep.subr.mxu0 0.0
    %546 = vmatpush1.xpose.msra.mxu0 0.0
    %547 = vmatprep.subr.mxu0 0.0
    %548 = vmatpush1.xpose.msra.mxu0 0.0
    %549 = vmatprep.subr.mxu0 0.0
    %550 = vmatpush1.xpose.msra.mxu0 0.0
    %551 = vmatprep.subr.mxu0 0.0
    %552 = vmatpush1.xpose.msra.mxu0 0.0
    %553 = vmatprep.subr.mxu0 0.0
    %554 = vmatpush1.xpose.msra.mxu0 0.0
    %555 = vmatprep.subr.mxu0 0.0
    %556 = vmatpush1.xpose.msra.mxu0 0.0
    %557 = vmatprep.subr.mxu0 0.0
    %558 = vmatpush1.xpose.msra.mxu0 0.0
    %559 = vmatprep.subr.mxu0 0.0
    %560 = vmatpush1.xpose.msra.mxu0 0.0
    %561 = vmatprep.subr.mxu0 0.0
    %562 = vmatpush1.xpose.msra.mxu0 0.0
    %563 = vmatprep.subr.mxu0 0.0
    %564 = vmatpush1.xpose.msra.mxu0 0.0
    %565 = vmatprep.subr.mxu0 0.0
    %566 = vmatpush1.xpose.msra.mxu0 0.0
    %567 = vmatprep.subr.mxu0 0.0
    %568 = vmatpush1.xpose.msra.mxu0 0.0
    %569 = vmatprep.subr.mxu0 0.0
    %570 = vmatpush1.xpose.msra.mxu0 0.0
    %571 = vmatprep.subr.mxu0 0.0
    %572 = vmatpush1.xpose.msra.mxu0 0.0
    %573 = vmatprep.subr.mxu0 0.0
    %574 = vmatpush1.xpose.msra.mxu0 0.0
    %575 = vmatprep.subr.mxu0 0.0
    %576 = vmatpush1.xpose.msra.mxu0 0.0
    %577 = vmatprep.subr.mxu0 0.0
    %578 = vmatpush1.xpose.msra.mxu0 0.0
    %579 = vmatprep.subr.mxu0 0.0
    %580 = vmatpush1.xpose.msra.mxu0 0.0
    %581 = vmatprep.subr.mxu0 0.0
    %582 = vmatpush1.xpose.msra.mxu0 0.0
    %583 = vmatprep.subr.mxu0 0.0
    %584 = vmatpush1.xpose.msra.mxu0 0.0
    %585 = vmatprep.subr.mxu0 0.0
    %586 = vmatpush1.xpose.msra.mxu0 0.0
    %587 = vmatprep.subr.mxu0 0.0
    %588 = vmatpush1.xpose.msra.mxu0 0.0
    %589 = vmatprep.subr.mxu0 0.0
    %590 = vmatpush1.xpose.msra.mxu0 0.0
    %591 = vmatprep.subr.mxu0 0.0
    %592 = vmatpush1.xpose.msra.mxu0 0.0
    %593 = vmatprep.subr.mxu0 0.0
    %594 = vmatpush1.xpose.msra.mxu0 0.0
    %595 = vmatprep.subr.mxu0 0.0
    %596 = vmatpush1.xpose.msra.mxu0 0.0
    %597 = vmatprep.subr.mxu0 0.0
    %598 = vmatpush1.xpose.msra.mxu0 0.0
    %599 = vmatprep.subr.mxu0 0.0
    %600 = vmatpush1.xpose.msra.mxu0 0.0
    %601 = vmatprep.subr.mxu0 0.0
    %602 = vmatpush1.xpose.msra.mxu0 0.0
    %603 = vmatprep.subr.mxu0 0.0
    %604 = vmatpush1.xpose.msra.mxu0 0.0
    %605 = vmatprep.mubr.f32.mxu0 0.0
    %606 = vmatmul.mubr.f32.gmra.mrb[0].mxu0 %v537
    %v607 = vpop.f32.mrb[0].mxu0
    %v608 = vadd.f32 0.0, %v607
    %v609 = vpop.f32.mrb[0].mxu0
    %610 = vdwg.mxu0
    %611 = vrot.lane.b32.xlu0 %v182, 120
    %v612 = vpop.permute.xlu0 %611
    %613 = vrot.lane.b32.xlu0 %v182, 88
    %v614 = vpop.permute.xlu0 %613
    %v615 = vsel %vm194, %v612, 0
    %v617 = vsel %vm194, %v614, 0
    %619 = vmatprep.subr.mxu0 0.0
    %620 = vmatpush1.xpose.msra.mxu0 %v617
    %621 = vmatprep.subr.mxu0 0.0
    %622 = vmatpush1.xpose.msra.mxu0 0.0
    %623 = vmatprep.subr.mxu0 0.0
    %624 = vmatpush1.xpose.msra.mxu0 0.0
    %625 = vmatprep.subr.mxu0 0.0
    %626 = vmatpush1.xpose.msra.mxu0 0.0
    %627 = vmatprep.subr.mxu0 0.0
    %628 = vmatpush1.xpose.msra.mxu0 0.0
    %629 = vmatprep.subr.mxu0 0.0
    %630 = vmatpush1.xpose.msra.mxu0 0.0
    %631 = vmatprep.subr.mxu0 0.0
    %632 = vmatpush1.xpose.msra.mxu0 0.0
    %633 = vmatprep.subr.mxu0 0.0
    %634 = vmatpush1.xpose.msra.mxu0 0.0
    %635 = vmatprep.subr.mxu0 0.0
    %636 = vmatpush1.xpose.msra.mxu0 0.0
    %637 = vmatprep.subr.mxu0 0.0
    %638 = vmatpush1.xpose.msra.mxu0 0.0
    %639 = vmatprep.subr.mxu0 0.0
    %640 = vmatpush1.xpose.msra.mxu0 0.0
    %641 = vmatprep.subr.mxu0 0.0
    %642 = vmatpush1.xpose.msra.mxu0 0.0
    %643 = vmatprep.subr.mxu0 0.0
    %644 = vmatpush1.xpose.msra.mxu0 0.0
    %645 = vmatprep.subr.mxu0 0.0
    %646 = vmatpush1.xpose.msra.mxu0 0.0
    %647 = vmatprep.subr.mxu0 0.0
    %648 = vmatpush1.xpose.msra.mxu0 0.0
    %649 = vmatprep.subr.mxu0 0.0
    %650 = vmatpush1.xpose.msra.mxu0 0.0
    %651 = vmatprep.subr.mxu0 0.0
    %652 = vmatpush1.xpose.msra.mxu0 0.0
    %653 = vmatprep.subr.mxu0 0.0
    %654 = vmatpush1.xpose.msra.mxu0 0.0
    %655 = vmatprep.subr.mxu0 0.0
    %656 = vmatpush1.xpose.msra.mxu0 0.0
    %657 = vmatprep.subr.mxu0 0.0
    %658 = vmatpush1.xpose.msra.mxu0 0.0
    %659 = vmatprep.subr.mxu0 0.0
    %660 = vmatpush1.xpose.msra.mxu0 0.0
    %661 = vmatprep.subr.mxu0 0.0
    %662 = vmatpush1.xpose.msra.mxu0 0.0
    %663 = vmatprep.subr.mxu0 0.0
    %664 = vmatpush1.xpose.msra.mxu0 0.0
    %665 = vmatprep.subr.mxu0 0.0
    %666 = vmatpush1.xpose.msra.mxu0 0.0
    %667 = vmatprep.subr.mxu0 0.0
    %668 = vmatpush1.xpose.msra.mxu0 0.0
    %669 = vmatprep.subr.mxu0 0.0
    %670 = vmatpush1.xpose.msra.mxu0 0.0
    %671 = vmatprep.subr.mxu0 0.0
    %672 = vmatpush1.xpose.msra.mxu0 0.0
    %673 = vmatprep.subr.mxu0 0.0
    %674 = vmatpush1.xpose.msra.mxu0 0.0
    %675 = vmatprep.subr.mxu0 0.0
    %676 = vmatpush1.xpose.msra.mxu0 0.0
    %677 = vmatprep.subr.mxu0 0.0
    %678 = vmatpush1.xpose.msra.mxu0 0.0
    %679 = vmatprep.subr.mxu0 0.0
    %680 = vmatpush1.xpose.msra.mxu0 0.0
    %681 = vmatprep.subr.mxu0 0.0
    %682 = vmatpush1.xpose.msra.mxu0 0.0
    %683 = vmatprep.mubr.f32.mxu0 0.0
    %684 = vmatmul.mubr.f32.gmra.mrb[0].mxu0 %v615
    %v685 = vpop.f32.mrb[0].mxu0
    %v686 = vadd.f32 0.0, %v685
    %v687 = vpop.f32.mrb[0].mxu0
    %688 = vdwg.mxu0
    %v689 = vmul.f32 %v608, 0.35355338
    %v690 = vmul.f32 %v686, 0.35355338
    %v691 = vadd.f32 %v689, %v185
    %v692 = vadd.f32 %v690, %v186
    %v693 = vsel %vm194, %v691, -inf
    %694 = vmax.xlane.f32.xlu0 %v693
    %v695 = vpop.xlane.xlu0 %694
    %v696 = vsel %vm194, %v692, -inf
    %697 = vmax.xlane.f32.xlu0 %v696
    %v698 = vpop.xlane.xlu0 %697
    %v699 = vsub.f32 %v691, %v695
    %v700 = vsub.f32 %v692, %v698
    %v701 = vmul.f32 %v699, 1.442695
    %v702 = vpow.pop %v701
    %v703 = vmul.f32 %v700, 1.442695
    %v704 = vpow.pop %v703
    %v705 = vsel %vm194, %v702, 0.0
    %706 = vadd.xlane.f32.xlu0 %v705
    %v707 = vpop.xlane.xlu0 %706
    %v708 = vsel %vm194, %v704, 0.0
    %709 = vadd.xlane.f32.xlu0 %v708
    %v710 = vpop.xlane.xlu0 %709
    %v711 = vrcp.pop %v707
    %v712 = vrcp.pop %v710
    %v713 = vmul.f32 %v702, %v711
    %v714 = vmul.f32 %v704, %v712
    %715 = vrot.lane.b32.xlu0 %v177, 56
    %v716 = vpop.permute.xlu0 %715
    %v719 = vsel %vm194, %v713, 0
    %721 = vmatprep.subr.mxu0 0.0
    %722 = vmatpush1.msra.mxu0 %v716
    %723 = vmatprep.subr.mxu0 0.0
    %724 = vmatpush1.msra.mxu0 0.0
    %725 = vmatprep.subr.mxu0 0.0
    %726 = vmatpush1.msra.mxu0 0.0
    %727 = vmatprep.subr.mxu0 0.0
    %728 = vmatpush1.msra.mxu0 0.0
    %729 = vmatprep.subr.mxu0 0.0
    %730 = vmatpush1.msra.mxu0 0.0
    %731 = vmatprep.subr.mxu0 0.0
    %732 = vmatpush1.msra.mxu0 0.0
    %733 = vmatprep.subr.mxu0 0.0
    %734 = vmatpush1.msra.mxu0 0.0
    %735 = vmatprep.subr.mxu0 0.0
    %736 = vmatpush1.msra.mxu0 0.0
    %737 = vmatprep.subr.mxu0 0.0
    %738 = vmatpush1.msra.mxu0 0.0
    %739 = vmatprep.subr.mxu0 0.0
    %740 = vmatpush1.msra.mxu0 0.0
    %741 = vmatprep.subr.mxu0 0.0
    %742 = vmatpush1.msra.mxu0 0.0
    %743 = vmatprep.subr.mxu0 0.0
    %744 = vmatpush1.msra.mxu0 0.0
    %745 = vmatprep.subr.mxu0 0.0
    %746 = vmatpush1.msra.mxu0 0.0
    %747 = vmatprep.subr.mxu0 0.0
    %748 = vmatpush1.msra.mxu0 0.0
    %749 = vmatprep.subr.mxu0 0.0
    %750 = vmatpush1.msra.mxu0 0.0
    %751 = vmatprep.subr.mxu0 0.0
    %752 = vmatpush1.msra.mxu0 0.0
    %753 = vmatprep.subr.mxu0 0.0
    %754 = vmatpush1.msra.mxu0 0.0
    %755 = vmatprep.subr.mxu0 0.0
    %756 = vmatpush1.msra.mxu0 0.0
    %757 = vmatprep.subr.mxu0 0.0
    %758 = vmatpush1.msra.mxu0 0.0
    %759 = vmatprep.subr.mxu0 0.0
    %760 = vmatpush1.msra.mxu0 0.0
    %761 = vmatprep.subr.mxu0 0.0
    %762 = vmatpush1.msra.mxu0 0.0
    %763 = vmatprep.subr.mxu0 0.0
    %764 = vmatpush1.msra.mxu0 0.0
    %765 = vmatprep.subr.mxu0 0.0
    %766 = vmatpush1.msra.mxu0 0.0
    %767 = vmatprep.subr.mxu0 0.0
    %768 = vmatpush1.msra.mxu0 0.0
    %769 = vmatprep.subr.mxu0 0.0
    %770 = vmatpush1.msra.mxu0 0.0
    %771 = vmatprep.subr.mxu0 0.0
    %772 = vmatpush1.msra.mxu0 0.0
    %773 = vmatprep.subr.mxu0 0.0
    %774 = vmatpush1.msra.mxu0 0.0
    %775 = vmatprep.subr.mxu0 0.0
    %776 = vmatpush1.msra.mxu0 0.0
    %777 = vmatprep.subr.mxu0 0.0
    %778 = vmatpush1.msra.mxu0 0.0
    %779 = vmatprep.subr.mxu0 0.0
    %780 = vmatpush1.msra.mxu0 0.0
    %781 = vmatprep.subr.mxu0 0.0
    %782 = vmatpush1.msra.mxu0 0.0
    %783 = vmatprep.subr.mxu0 0.0
    %784 = vmatpush1.msra.mxu0 0.0
    %785 = vmatprep.mubr.f32.mxu0 0.0
    %786 = vmatmul.mubr.f32.gmra.mrb[0].mxu0 %v719
    %v787 = vpop.f32.mrb[0].mxu0
    %v788 = vadd.f32 0.0, %v787
    %v789 = vpop.f32.mrb[0].mxu0
    %790 = vdwg.mxu0
    %791 = vrot.lane.b32.xlu0 %v182, 56
    %v792 = vpop.permute.xlu0 %791
    %v795 = vsel %vm194, %v714, 0
    %797 = vmatprep.subr.mxu0 0.0
    %798 = vmatpush1.msra.mxu0 %v792
    %799 = vmatprep.subr.mxu0 0.0
    %800 = vmatpush1.msra.mxu0 0.0
    %801 = vmatprep.subr.mxu0 0.0
    %802 = vmatpush1.msra.mxu0 0.0
    %803 = vmatprep.subr.mxu0 0.0
    %804 = vmatpush1.msra.mxu0 0.0
    %805 = vmatprep.subr.mxu0 0.0
    %806 = vmatpush1.msra.mxu0 0.0
    %807 = vmatprep.subr.mxu0 0.0
    %808 = vmatpush1.msra.mxu0 0.0
    %809 = vmatprep.subr.mxu0 0.0
    %810 = vmatpush1.msra.mxu0 0.0
    %811 = vmatprep.subr.mxu0 0.0
    %812 = vmatpush1.msra.mxu0 0.0
    %813 = vmatprep.subr.mxu0 0.0
    %814 = vmatpush1.msra.mxu0 0.0
    %815 = vmatprep.subr.mxu0 0.0
    %816 = vmatpush1.msra.mxu0 0.0
    %817 = vmatprep.subr.mxu0 0.0
    %818 = vmatpush1.msra.mxu0 0.0
    %819 = vmatprep.subr.mxu0 0.0
    %820 = vmatpush1.msra.mxu0 0.0
    %821 = vmatprep.subr.mxu0 0.0
    %822 = vmatpush1.msra.mxu0 0.0
    %823 = vmatprep.subr.mxu0 0.0
    %824 = vmatpush1.msra.mxu0 0.0
    %825 = vmatprep.subr.mxu0 0.0
    %826 = vmatpush1.msra.mxu0 0.0
    %827 = vmatprep.subr.mxu0 0.0
    %828 = vmatpush1.msra.mxu0 0.0
    %829 = vmatprep.subr.mxu0 0.0
    %830 = vmatpush1.msra.mxu0 0.0
    %831 = vmatprep.subr.mxu0 0.0
    %832 = vmatpush1.msra.mxu0 0.0
    %833 = vmatprep.subr.mxu0 0.0
    %834 = vmatpush1.msra.mxu0 0.0
    %835 = vmatprep.subr.mxu0 0.0
    %836 = vmatpush1.msra.mxu0 0.0
    %837 = vmatprep.subr.mxu0 0.0
    %838 = vmatpush1.msra.mxu0 0.0
    %839 = vmatprep.subr.mxu0 0.0
    %840 = vmatpush1.msra.mxu0 0.0
    %841 = vmatprep.subr.mxu0 0.0
    %842 = vmatpush1.msra.mxu0 0.0
    %843 = vmatprep.subr.mxu0 0.0
    %844 = vmatpush1.msra.mxu0 0.0
    %845 = vmatprep.subr.mxu0 0.0
    %846 = vmatpush1.msra.mxu0 0.0
    %847 = vmatprep.subr.mxu0 0.0
    %848 = vmatpush1.msra.mxu0 0.0
    %849 = vmatprep.subr.mxu0 0.0
    %850 = vmatpush1.msra.mxu0 0.0
    %851 = vmatprep.subr.mxu0 0.0
    %852 = vmatpush1.msra.mxu0 0.0
    %853 = vmatprep.subr.mxu0 0.0
    %854 = vmatpush1.msra.mxu0 0.0
    %855 = vmatprep.subr.mxu0 0.0
    %856 = vmatpush1.msra.mxu0 0.0
    %857 = vmatprep.subr.mxu0 0.0
    %858 = vmatpush1.msra.mxu0 0.0
    %859 = vmatprep.subr.mxu0 0.0
    %860 = vmatpush1.msra.mxu0 0.0
    %861 = vmatprep.mubr.f32.mxu0 0.0
    %862 = vmatmul.mubr.f32.gmra.mrb[0].mxu0 %v795
    %v863 = vpop.f32.mrb[0].mxu0
    %v864 = vadd.f32 0.0, %v863
    %v865 = vpop.f32.mrb[0].mxu0
    %866 = vdwg.mxu0
    %v867 = vsel %vm194, %v788, 0.0
    %868 = vadd.xlane.f32.xlu0 %v867
    %v869 = vpop.xlane.xlu0 %868
    %v870 = vsel %vm194, %v864, 0.0
    %871 = vadd.xlane.f32.xlu0 %v870
    %v872 = vpop.xlane.xlu0 %871
    %v873 = vmul.f32 %v869, %v530
    %v874 = vmul.f32 %v872, %v530
    %v876 = vsel %vm194, %v788, 0
    %v879 = vsel %vm194, %v864, 0
    %881 = vmatprep.subr.mxu0 0.0
    %882 = vmatpush1.msra.mxu0 %v188
    %883 = vmatprep.subr.mxu0 0.0
    %884 = vmatpush1.msra.mxu0 0.0
    %885 = vmatprep.subr.mxu0 0.0
    %886 = vmatpush1.msra.mxu0 0.0
    %887 = vmatprep.subr.mxu0 0.0
    %888 = vmatpush1.msra.mxu0 0.0
    %889 = vmatprep.subr.mxu0 0.0
    %890 = vmatpush1.msra.mxu0 0.0
    %891 = vmatprep.subr.mxu0 0.0
    %892 = vmatpush1.msra.mxu0 0.0
    %893 = vmatprep.subr.mxu0 0.0
    %894 = vmatpush1.msra.mxu0 0.0
    %895 = vmatprep.subr.mxu0 0.0
    %896 = vmatpush1.msra.mxu0 0.0
    %897 = vmatprep.subr.mxu0 0.0
    %898 = vmatpush1.msra.mxu0 0.0
    %899 = vmatprep.subr.mxu0 0.0
    %900 = vmatpush1.msra.mxu0 0.0
    %901 = vmatprep.subr.mxu0 0.0
    %902 = vmatpush1.msra.mxu0 0.0
    %903 = vmatprep.subr.mxu0 0.0
    %904 = vmatpush1.msra.mxu0 0.0
    %905 = vmatprep.subr.mxu0 0.0
    %906 = vmatpush1.msra.mxu0 0.0
    %907 = vmatprep.subr.mxu0 0.0
    %908 = vmatpush1.msra.mxu0 0.0
    %909 = vmatprep.subr.mxu0 0.0
    %910 = vmatpush1.msra.mxu0 0.0
    %911 = vmatprep.subr.mxu0 0.0
    %912 = vmatpush1.msra.mxu0 0.0
    %913 = vmatprep.subr.mxu0 0.0
    %914 = vmatpush1.msra.mxu0 0.0
    %915 = vmatprep.subr.mxu0 0.0
    %916 = vmatpush1.msra.mxu0 0.0
    %917 = vmatprep.subr.mxu0 0.0
    %918 = vmatpush1.msra.mxu0 0.0
    %919 = vmatprep.subr.mxu0 0.0
    %920 = vmatpush1.msra.mxu0 0.0
    %921 = vmatprep.subr.mxu0 0.0
    %922 = vmatpush1.msra.mxu0 0.0
    %923 = vmatprep.subr.mxu0 0.0
    %924 = vmatpush1.msra.mxu0 0.0
    %925 = vmatprep.subr.mxu0 0.0
    %926 = vmatpush1.msra.mxu0 0.0
    %927 = vmatprep.subr.mxu0 0.0
    %928 = vmatpush1.msra.mxu0 0.0
    %929 = vmatprep.subr.mxu0 0.0
    %930 = vmatpush1.msra.mxu0 0.0
    %931 = vmatprep.subr.mxu0 0.0
    %932 = vmatpush1.msra.mxu0 0.0
    %933 = vmatprep.subr.mxu0 0.0
    %934 = vmatpush1.msra.mxu0 0.0
    %935 = vmatprep.subr.mxu0 0.0
    %936 = vmatpush1.msra.mxu0 0.0
    %937 = vmatprep.subr.mxu0 0.0
    %938 = vmatpush1.msra.mxu0 0.0
    %939 = vmatprep.subr.mxu0 0.0
    %940 = vmatpush1.msra.mxu0 0.0
    %941 = vmatprep.subr.mxu0 0.0
    %942 = vmatpush1.msra.mxu0 0.0
    %943 = vmatprep.subr.mxu0 0.0
    %944 = vmatpush1.msra.mxu0 0.0
    %945 = vmatprep.mubr.f32.mxu0 0.0
    %946 = vmatmul.mubr.f32.gmra.mrb[0].mxu0 %v876
    %v947 = vpop.f32.mrb[0].mxu0
    %v948 = vadd.f32 0.0, %v947
    %v949 = vpop.f32.mrb[0].mxu0
    %950 = vmatprep.mubr.f32.mxu0 0.0
    %951 = vmatmul.mubr.f32.gmra.mrb[0].mxu0 %v879
    %v952 = vpop.f32.mrb[0].mxu0
    %v953 = vadd.f32 0.0, %v952
    %v954 = vpop.f32.mrb[0].mxu0
    %955 = vdwg.mxu0
    %v957 = vsel %vm194, %v445, 0
    %v960 = vsel %vm194, %v521, 0
    %962 = vmatprep.subr.mxu0 0.0
    %963 = vmatpush1.msra.mxu0 %v187
    %964 = vmatprep.subr.mxu0 0.0
    %965 = vmatpush1.msra.mxu0 0.0
    %966 = vmatprep.subr.mxu0 0.0
    %967 = vmatpush1.msra.mxu0 0.0
    %968 = vmatprep.subr.mxu0 0.0
    %969 = vmatpush1.msra.mxu0 0.0
    %970 = vmatprep.subr.mxu0 0.0
    %971 = vmatpush1.msra.mxu0 0.0
    %972 = vmatprep.subr.mxu0 0.0
    %973 = vmatpush1.msra.mxu0 0.0
    %974 = vmatprep.subr.mxu0 0.0
    %975 = vmatpush1.msra.mxu0 0.0
    %976 = vmatprep.subr.mxu0 0.0
    %977 = vmatpush1.msra.mxu0 0.0
    %978 = vmatprep.subr.mxu0 0.0
    %979 = vmatpush1.msra.mxu0 0.0
    %980 = vmatprep.subr.mxu0 0.0
    %981 = vmatpush1.msra.mxu0 0.0
    %982 = vmatprep.subr.mxu0 0.0
    %983 = vmatpush1.msra.mxu0 0.0
    %984 = vmatprep.subr.mxu0 0.0
    %985 = vmatpush1.msra.mxu0 0.0
    %986 = vmatprep.subr.mxu0 0.0
    %987 = vmatpush1.msra.mxu0 0.0
    %988 = vmatprep.subr.mxu0 0.0
    %989 = vmatpush1.msra.mxu0 0.0
    %990 = vmatprep.subr.mxu0 0.0
    %991 = vmatpush1.msra.mxu0 0.0
    %992 = vmatprep.subr.mxu0 0.0
    %993 = vmatpush1.msra.mxu0 0.0
    %994 = vmatprep.subr.mxu0 0.0
    %995 = vmatpush1.msra.mxu0 0.0
    %996 = vmatprep.subr.mxu0 0.0
    %997 = vmatpush1.msra.mxu0 0.0
    %998 = vmatprep.subr.mxu0 0.0
    %999 = vmatpush1.msra.mxu0 0.0
    %1000 = vmatprep.subr.mxu0 0.0
    %1001 = vmatpush1.msra.mxu0 0.0
    %1002 = vmatprep.subr.mxu0 0.0
    %1003 = vmatpush1.msra.mxu0 0.0
    %1004 = vmatprep.subr.mxu0 0.0
    %1005 = vmatpush1.msra.mxu0 0.0
    %1006 = vmatprep.subr.mxu0 0.0
    %1007 = vmatpush1.msra.mxu0 0.0
    %1008 = vmatprep.subr.mxu0 0.0
    %1009 = vmatpush1.msra.mxu0 0.0
    %1010 = vmatprep.subr.mxu0 0.0
    %1011 = vmatpush1.msra.mxu0 0.0
    %1012 = vmatprep.subr.mxu0 0.0
    %1013 = vmatpush1.msra.mxu0 0.0
    %1014 = vmatprep.subr.mxu0 0.0
    %1015 = vmatpush1.msra.mxu0 0.0
    %1016 = vmatprep.subr.mxu0 0.0
    %1017 = vmatpush1.msra.mxu0 0.0
    %1018 = vmatprep.subr.mxu0 0.0
    %1019 = vmatpush1.msra.mxu0 0.0
    %1020 = vmatprep.subr.mxu0 0.0
    %1021 = vmatpush1.msra.mxu0 0.0
    %1022 = vmatprep.subr.mxu0 0.0
    %1023 = vmatpush1.msra.mxu0 0.0
    %1024 = vmatprep.subr.mxu0 0.0
    %1025 = vmatpush1.msra.mxu0 0.0
    %1026 = vmatprep.mubr.f32.mxu0 0.0
    %1027 = vmatmul.mubr.f32.gmra.mrb[0].mxu0 %v957
    %v1028 = vpop.f32.mrb[0].mxu0
    %v1029 = vadd.f32 %v948, %v1028
    %v1030 = vpop.f32.mrb[0].mxu0
    %1031 = vmatprep.mubr.f32.mxu0 0.0
    %1032 = vmatmul.mubr.f32.gmra.mrb[0].mxu0 %v960
    %v1033 = vpop.f32.mrb[0].mxu0
    %v1034 = vadd.f32 %v953, %v1033
    %v1035 = vpop.f32.mrb[0].mxu0
    %1036 = vdwg.mxu0
    %1037 = vrot.lane.b32.xlu0 %v177, 112
    %v1038 = vpop.permute.xlu0 %1037
    %1039 = vrot.lane.b32.xlu0 %v177, 80
    %v1040 = vpop.permute.xlu0 %1039
    %v1041 = vsel %vm194, %v1038, 0
    %v1043 = vsel %vm194, %v1040, 0
    %1045 = vmatprep.subr.mxu0 0.0
    %1046 = vmatpush1.xpose.msra.mxu0 %v1043
    %1047 = vmatprep.subr.mxu0 0.0
    %1048 = vmatpush1.xpose.msra.mxu0 0.0
    %1049 = vmatprep.subr.mxu0 0.0
    %1050 = vmatpush1.xpose.msra.mxu0 0.0
    %1051 = vmatprep.subr.mxu0 0.0
    %1052 = vmatpush1.xpose.msra.mxu0 0.0
    %1053 = vmatprep.subr.mxu0 0.0
    %1054 = vmatpush1.xpose.msra.mxu0 0.0
    %1055 = vmatprep.subr.mxu0 0.0
    %1056 = vmatpush1.xpose.msra.mxu0 0.0
    %1057 = vmatprep.subr.mxu0 0.0
    %1058 = vmatpush1.xpose.msra.mxu0 0.0
    %1059 = vmatprep.subr.mxu0 0.0
    %1060 = vmatpush1.xpose.msra.mxu0 0.0
    %1061 = vmatprep.subr.mxu0 0.0
    %1062 = vmatpush1.xpose.msra.mxu0 0.0
    %1063 = vmatprep.subr.mxu0 0.0
    %1064 = vmatpush1.xpose.msra.mxu0 0.0
    %1065 = vmatprep.subr.mxu0 0.0
    %1066 = vmatpush1.xpose.msra.mxu0 0.0
    %1067 = vmatprep.subr.mxu0 0.0
    %1068 = vmatpush1.xpose.msra.mxu0 0.0
    %1069 = vmatprep.subr.mxu0 0.0
    %1070 = vmatpush1.xpose.msra.mxu0 0.0
    %1071 = vmatprep.subr.mxu0 0.0
    %1072 = vmatpush1.xpose.msra.mxu0 0.0
    %1073 = vmatprep.subr.mxu0 0.0
    %1074 = vmatpush1.xpose.msra.mxu0 0.0
    %1075 = vmatprep.subr.mxu0 0.0
    %1076 = vmatpush1.xpose.msra.mxu0 0.0
    %1077 = vmatprep.subr.mxu0 0.0
    %1078 = vmatpush1.xpose.msra.mxu0 0.0
    %1079 = vmatprep.subr.mxu0 0.0
    %1080 = vmatpush1.xpose.msra.mxu0 0.0
    %1081 = vmatprep.subr.mxu0 0.0
    %1082 = vmatpush1.xpose.msra.mxu0 0.0
    %1083 = vmatprep.subr.mxu0 0.0
    %1084 = vmatpush1.xpose.msra.mxu0 0.0
    %1085 = vmatprep.subr.mxu0 0.0
    %1086 = vmatpush1.xpose.msra.mxu0 0.0
    %1087 = vmatprep.subr.mxu0 0.0
    %1088 = vmatpush1.xpose.msra.mxu0 0.0
    %1089 = vmatprep.subr.mxu0 0.0
    %1090 = vmatpush1.xpose.msra.mxu0 0.0
    %1091 = vmatprep.subr.mxu0 0.0
    %1092 = vmatpush1.xpose.msra.mxu0 0.0
    %1093 = vmatprep.subr.mxu0 0.0
    %1094 = vmatpush1.xpose.msra.mxu0 0.0
    %1095 = vmatprep.subr.mxu0 0.0
    %1096 = vmatpush1.xpose.msra.mxu0 0.0
    %1097 = vmatprep.subr.mxu0 0.0
    %1098 = vmatpush1.xpose.msra.mxu0 0.0
    %1099 = vmatprep.subr.mxu0 0.0
    %1100 = vmatpush1.xpose.msra.mxu0 0.0
    %1101 = vmatprep.subr.mxu0 0.0
    %1102 = vmatpush1.xpose.msra.mxu0 0.0
    %1103 = vmatprep.subr.mxu0 0.0
    %1104 = vmatpush1.xpose.msra.mxu0 0.0
    %1105 = vmatprep.subr.mxu0 0.0
    %1106 = vmatpush1.xpose.msra.mxu0 0.0
    %1107 = vmatprep.subr.mxu0 0.0
    %1108 = vmatpush1.xpose.msra.mxu0 0.0
    %1109 = vmatprep.mubr.f32.mxu0 0.0
    %1110 = vmatmul.mubr.f32.gmra.mrb[0].mxu0 %v1041
    %v1111 = vpop.f32.mrb[0].mxu0
    %v1112 = vadd.f32 0.0, %v1111
    %v1113 = vpop.f32.mrb[0].mxu0
    %1114 = vdwg.mxu0
    %1115 = vrot.lane.b32.xlu0 %v182, 112
    %v1116 = vpop.permute.xlu0 %1115
    %1117 = vrot.lane.b32.xlu0 %v182, 80
    %v1118 = vpop.permute.xlu0 %1117
    %v1119 = vsel %vm194, %v1116, 0
    %v1121 = vsel %vm194, %v1118, 0
    %1123 = vmatprep.subr.mxu0 0.0
    %1124 = vmatpush1.xpose.msra.mxu0 %v1121
    %1125 = vmatprep.subr.mxu0 0.0
    %1126 = vmatpush1.xpose.msra.mxu0 0.0
    %1127 = vmatprep.subr.mxu0 0.0
    %1128 = vmatpush1.xpose.msra.mxu0 0.0
    %1129 = vmatprep.subr.mxu0 0.0
    %1130 = vmatpush1.xpose.msra.mxu0 0.0
    %1131 = vmatprep.subr.mxu0 0.0
    %1132 = vmatpush1.xpose.msra.mxu0 0.0
    %1133 = vmatprep.subr.mxu0 0.0
    %1134 = vmatpush1.xpose.msra.mxu0 0.0
    %1135 = vmatprep.subr.mxu0 0.0
    %1136 = vmatpush1.xpose.msra.mxu0 0.0
    %1137 = vmatprep.subr.mxu0 0.0
    %1138 = vmatpush1.xpose.msra.mxu0 0.0
    %1139 = vmatprep.subr.mxu0 0.0
    %1140 = vmatpush1.xpose.msra.mxu0 0.0
    %1141 = vmatprep.subr.mxu0 0.0
    %1142 = vmatpush1.xpose.msra.mxu0 0.0
    %1143 = vmatprep.subr.mxu0 0.0
    %1144 = vmatpush1.xpose.msra.mxu0 0.0
    %1145 = vmatprep.subr.mxu0 0.0
    %1146 = vmatpush1.xpose.msra.mxu0 0.0
    %1147 = vmatprep.subr.mxu0 0.0
    %1148 = vmatpush1.xpose.msra.mxu0 0.0
    %1149 = vmatprep.subr.mxu0 0.0
    %1150 = vmatpush1.xpose.msra.mxu0 0.0
    %1151 = vmatprep.subr.mxu0 0.0
    %1152 = vmatpush1.xpose.msra.mxu0 0.0
    %1153 = vmatprep.subr.mxu0 0.0
    %1154 = vmatpush1.xpose.msra.mxu0 0.0
    %1155 = vmatprep.subr.mxu0 0.0
    %1156 = vmatpush1.xpose.msra.mxu0 0.0
    %1157 = vmatprep.subr.mxu0 0.0
    %1158 = vmatpush1.xpose.msra.mxu0 0.0
    %1159 = vmatprep.subr.mxu0 0.0
    %1160 = vmatpush1.xpose.msra.mxu0 0.0
    %1161 = vmatprep.subr.mxu0 0.0
    %1162 = vmatpush1.xpose.msra.mxu0 0.0
    %1163 = vmatprep.subr.mxu0 0.0
    %1164 = vmatpush1.xpose.msra.mxu0 0.0
    %1165 = vmatprep.subr.mxu0 0.0
    %1166 = vmatpush1.xpose.msra.mxu0 0.0
    %1167 = vmatprep.subr.mxu0 0.0
    %1168 = vmatpush1.xpose.msra.mxu0 0.0
    %1169 = vmatprep.subr.mxu0 0.0
    %1170 = vmatpush1.xpose.msra.mxu0 0.0
    %1171 = vmatprep.subr.mxu0 0.0
    %1172 = vmatpush1.xpose.msra.mxu0 0.0
    %1173 = vmatprep.subr.mxu0 0.0
    %1174 = vmatpush1.xpose.msra.mxu0 0.0
    %1175 = vmatprep.subr.mxu0 0.0
    %1176 = vmatpush1.xpose.msra.mxu0 0.0
    %1177 = vmatprep.subr.mxu0 0.0
    %1178 = vmatpush1.xpose.msra.mxu0 0.0
    %1179 = vmatprep.subr.mxu0 0.0
    %1180 = vmatpush1.xpose.msra.mxu0 0.0
    %1181 = vmatprep.subr.mxu0 0.0
    %1182 = vmatpush1.xpose.msra.mxu0 0.0
    %1183 = vmatprep.subr.mxu0 0.0
    %1184 = vmatpush1.xpose.msra.mxu0 0.0
    %1185 = vmatprep.subr.mxu0 0.0
    %1186 = vmatpush1.xpose.msra.mxu0 0.0
    %1187 = vmatprep.mubr.f32.mxu0 0.0
    %1188 = vmatmul.mubr.f32.gmra.mrb[0].mxu0 %v1119
    %v1189 = vpop.f32.mrb[0].mxu0
    %v1190 = vadd.f32 0.0, %v1189
    %v1191 = vpop.f32.mrb[0].mxu0
    %1192 = vdwg.mxu0
    %v1193 = vmul.f32 %v1112, 0.35355338
    %v1194 = vmul.f32 %v1190, 0.35355338
    %v1195 = vadd.f32 %v1193, %v185
    %v1196 = vadd.f32 %v1194, %v186
    %v1197 = vsel %vm194, %v1195, -inf
    %1198 = vmax.xlane.f32.xlu0 %v1197
    %v1199 = vpop.xlane.xlu0 %1198
    %v1200 = vsel %vm194, %v1196, -inf
    %1201 = vmax.xlane.f32.xlu0 %v1200
    %v1202 = vpop.xlane.xlu0 %1201
    %v1203 = vsub.f32 %v1195, %v1199
    %v1204 = vsub.f32 %v1196, %v1202
    %v1205 = vmul.f32 %v1203, 1.442695
    %v1206 = vpow.pop %v1205
    %v1207 = vmul.f32 %v1204, 1.442695
    %v1208 = vpow.pop %v1207
    %v1209 = vsel %vm194, %v1206, 0.0
    %1210 = vadd.xlane.f32.xlu0 %v1209
    %v1211 = vpop.xlane.xlu0 %1210
    %v1212 = vsel %vm194, %v1208, 0.0
    %1213 = vadd.xlane.f32.xlu0 %v1212
    %v1214 = vpop.xlane.xlu0 %1213
    %v1215 = vrcp.pop %v1211
    %v1216 = vrcp.pop %v1214
    %v1217 = vmul.f32 %v1206, %v1215
    %v1218 = vmul.f32 %v1208, %v1216
    %1219 = vrot.lane.b32.xlu0 %v177, 48
    %v1220 = vpop.permute.xlu0 %1219
    %v1223 = vsel %vm194, %v1217, 0
    %1225 = vmatprep.subr.mxu0 0.0
    %1226 = vmatpush1.msra.mxu0 %v1220
    %1227 = vmatprep.subr.mxu0 0.0
    %1228 = vmatpush1.msra.mxu0 0.0
    %1229 = vmatprep.subr.mxu0 0.0
    %1230 = vmatpush1.msra.mxu0 0.0
    %1231 = vmatprep.subr.mxu0 0.0
    %1232 = vmatpush1.msra.mxu0 0.0
    %1233 = vmatprep.subr.mxu0 0.0
    %1234 = vmatpush1.msra.mxu0 0.0
    %1235 = vmatprep.subr.mxu0 0.0
    %1236 = vmatpush1.msra.mxu0 0.0
    %1237 = vmatprep.subr.mxu0 0.0
    %1238 = vmatpush1.msra.mxu0 0.0
    %1239 = vmatprep.subr.mxu0 0.0
    %1240 = vmatpush1.msra.mxu0 0.0
    %1241 = vmatprep.subr.mxu0 0.0
    %1242 = vmatpush1.msra.mxu0 0.0
    %1243 = vmatprep.subr.mxu0 0.0
    %1244 = vmatpush1.msra.mxu0 0.0
    %1245 = vmatprep.subr.mxu0 0.0
    %1246 = vmatpush1.msra.mxu0 0.0
    %1247 = vmatprep.subr.mxu0 0.0
    %1248 = vmatpush1.msra.mxu0 0.0
    %1249 = vmatprep.subr.mxu0 0.0
    %1250 = vmatpush1.msra.mxu0 0.0
    %1251 = vmatprep.subr.mxu0 0.0
    %1252 = vmatpush1.msra.mxu0 0.0
    %1253 = vmatprep.subr.mxu0 0.0
    %1254 = vmatpush1.msra.mxu0 0.0
    %1255 = vmatprep.subr.mxu0 0.0
    %1256 = vmatpush1.msra.mxu0 0.0
    %1257 = vmatprep.subr.mxu0 0.0
    %1258 = vmatpush1.msra.mxu0 0.0
    %1259 = vmatprep.subr.mxu0 0.0
    %1260 = vmatpush1.msra.mxu0 0.0
    %1261 = vmatprep.subr.mxu0 0.0
    %1262 = vmatpush1.msra.mxu0 0.0
    %1263 = vmatprep.subr.mxu0 0.0
    %1264 = vmatpush1.msra.mxu0 0.0
    %1265 = vmatprep.subr.mxu0 0.0
    %1266 = vmatpush1.msra.mxu0 0.0
    %1267 = vmatprep.subr.mxu0 0.0
    %1268 = vmatpush1.msra.mxu0 0.0
    %1269 = vmatprep.subr.mxu0 0.0
    %1270 = vmatpush1.msra.mxu0 0.0
    %1271 = vmatprep.subr.mxu0 0.0
    %1272 = vmatpush1.msra.mxu0 0.0
    %1273 = vmatprep.subr.mxu0 0.0
    %1274 = vmatpush1.msra.mxu0 0.0
    %1275 = vmatprep.subr.mxu0 0.0
    %1276 = vmatpush1.msra.mxu0 0.0
    %1277 = vmatprep.subr.mxu0 0.0
    %1278 = vmatpush1.msra.mxu0 0.0
    %1279 = vmatprep.subr.mxu0 0.0
    %1280 = vmatpush1.msra.mxu0 0.0
    %1281 = vmatprep.subr.mxu0 0.0
    %1282 = vmatpush1.msra.mxu0 0.0
    %1283 = vmatprep.subr.mxu0 0.0
    %1284 = vmatpush1.msra.mxu0 0.0
    %1285 = vmatprep.subr.mxu0 0.0
    %1286 = vmatpush1.msra.mxu0 0.0
    %1287 = vmatprep.subr.mxu0 0.0
    %1288 = vmatpush1.msra.mxu0 0.0
    %1289 = vmatprep.mubr.f32.mxu0 0.0
    %1290 = vmatmul.mubr.f32.gmra.mrb[0].mxu0 %v1223
    %v1291 = vpop.f32.mrb[0].mxu0
    %v1292 = vadd.f32 0.0, %v1291
    %v1293 = vpop.f32.mrb[0].mxu0
    %1294 = vdwg.mxu0
    %1295 = vrot.lane.b32.xlu0 %v182, 48
    %v1296 = vpop.permute.xlu0 %1295
    %v1299 = vsel %vm194, %v1218, 0
    %1301 = vmatprep.subr.mxu0 0.0
    %1302 = vmatpush1.msra.mxu0 %v1296
    %1303 = vmatprep.subr.mxu0 0.0
    %1304 = vmatpush1.msra.mxu0 0.0
    %1305 = vmatprep.subr.mxu0 0.0
    %1306 = vmatpush1.msra.mxu0 0.0
    %1307 = vmatprep.subr.mxu0 0.0
    %1308 = vmatpush1.msra.mxu0 0.0
    %1309 = vmatprep.subr.mxu0 0.0
    %1310 = vmatpush1.msra.mxu0 0.0
    %1311 = vmatprep.subr.mxu0 0.0
    %1312 = vmatpush1.msra.mxu0 0.0
    %1313 = vmatprep.subr.mxu0 0.0
    %1314 = vmatpush1.msra.mxu0 0.0
    %1315 = vmatprep.subr.mxu0 0.0
    %1316 = vmatpush1.msra.mxu0 0.0
    %1317 = vmatprep.subr.mxu0 0.0
    %1318 = vmatpush1.msra.mxu0 0.0
    %1319 = vmatprep.subr.mxu0 0.0
    %1320 = vmatpush1.msra.mxu0 0.0
    %1321 = vmatprep.subr.mxu0 0.0
    %1322 = vmatpush1.msra.mxu0 0.0
    %1323 = vmatprep.subr.mxu0 0.0
    %1324 = vmatpush1.msra.mxu0 0.0
    %1325 = vmatprep.subr.mxu0 0.0
    %1326 = vmatpush1.msra.mxu0 0.0
    %1327 = vmatprep.subr.mxu0 0.0
    %1328 = vmatpush1.msra.mxu0 0.0
    %1329 = vmatprep.subr.mxu0 0.0
    %1330 = vmatpush1.msra.mxu0 0.0
    %1331 = vmatprep.subr.mxu0 0.0
    %1332 = vmatpush1.msra.mxu0 0.0
    %1333 = vmatprep.subr.mxu0 0.0
    %1334 = vmatpush1.msra.mxu0 0.0
    %1335 = vmatprep.subr.mxu0 0.0
    %1336 = vmatpush1.msra.mxu0 0.0
    %1337 = vmatprep.subr.mxu0 0.0
    %1338 = vmatpush1.msra.mxu0 0.0
    %1339 = vmatprep.subr.mxu0 0.0
    %1340 = vmatpush1.msra.mxu0 0.0
    %1341 = vmatprep.subr.mxu0 0.0
    %1342 = vmatpush1.msra.mxu0 0.0
    %1343 = vmatprep.subr.mxu0 0.0
    %1344 = vmatpush1.msra.mxu0 0.0
    %1345 = vmatprep.subr.mxu0 0.0
    %1346 = vmatpush1.msra.mxu0 0.0
    %1347 = vmatprep.subr.mxu0 0.0
    %1348 = vmatpush1.msra.mxu0 0.0
    %1349 = vmatprep.subr.mxu0 0.0
    %1350 = vmatpush1.msra.mxu0 0.0
    %1351 = vmatprep.subr.mxu0 0.0
    %1352 = vmatpush1.msra.mxu0 0.0
    %1353 = vmatprep.subr.mxu0 0.0
    %1354 = vmatpush1.msra.mxu0 0.0
    %1355 = vmatprep.subr.mxu0 0.0
    %1356 = vmatpush1.msra.mxu0 0.0
    %1357 = vmatprep.subr.mxu0 0.0
    %1358 = vmatpush1.msra.mxu0 0.0
    %1359 = vmatprep.subr.mxu0 0.0
    %1360 = vmatpush1.msra.mxu0 0.0
    %1361 = vmatprep.subr.mxu0 0.0
    %1362 = vmatpush1.msra.mxu0 0.0
    %1363 = vmatprep.subr.mxu0 0.0
    %1364 = vmatpush1.msra.mxu0 0.0
    %1365 = vmatprep.mubr.f32.mxu0 0.0
    %1366 = vmatmul.mubr.f32.gmra.mrb[0].mxu0 %v1299
    %v1367 = vpop.f32.mrb[0].mxu0
    %v1368 = vadd.f32 0.0, %v1367
    %v1369 = vpop.f32.mrb[0].mxu0
    %1370 = vdwg.mxu0
    %v1371 = vsel %vm194, %v1292, 0.0
    %1372 = vadd.xlane.f32.xlu0 %v1371
    %v1373 = vpop.xlane.xlu0 %1372
    %v1374 = vsel %vm194, %v1368, 0.0
    %1375 = vadd.xlane.f32.xlu0 %v1374
    %v1376 = vpop.xlane.xlu0 %1375
    %v1377 = vmul.f32 %v1373, %v530
    %v1378 = vmul.f32 %v1376, %v530
    %v1380 = vsel %vm194, %v1292, 0
    %v1383 = vsel %vm194, %v1368, 0
    %1385 = vmatprep.subr.mxu0 0.0
    %1386 = vmatpush1.msra.mxu0 %v189
    %1387 = vmatprep.subr.mxu0 0.0
    %1388 = vmatpush1.msra.mxu0 0.0
    %1389 = vmatprep.subr.mxu0 0.0
    %1390 = vmatpush1.msra.mxu0 0.0
    %1391 = vmatprep.subr.mxu0 0.0
    %1392 = vmatpush1.msra.mxu0 0.0
    %1393 = vmatprep.subr.mxu0 0.0
    %1394 = vmatpush1.msra.mxu0 0.0
    %1395 = vmatprep.subr.mxu0 0.0
    %1396 = vmatpush1.msra.mxu0 0.0
    %1397 = vmatprep.subr.mxu0 0.0
    %1398 = vmatpush1.msra.mxu0 0.0
    %1399 = vmatprep.subr.mxu0 0.0
    %1400 = vmatpush1.msra.mxu0 0.0
    %1401 = vmatprep.subr.mxu0 0.0
    %1402 = vmatpush1.msra.mxu0 0.0
    %1403 = vmatprep.subr.mxu0 0.0
    %1404 = vmatpush1.msra.mxu0 0.0
    %1405 = vmatprep.subr.mxu0 0.0
    %1406 = vmatpush1.msra.mxu0 0.0
    %1407 = vmatprep.subr.mxu0 0.0
    %1408 = vmatpush1.msra.mxu0 0.0
    %1409 = vmatprep.subr.mxu0 0.0
    %1410 = vmatpush1.msra.mxu0 0.0
    %1411 = vmatprep.subr.mxu0 0.0
    %1412 = vmatpush1.msra.mxu0 0.0
    %1413 = vmatprep.subr.mxu0 0.0
    %1414 = vmatpush1.msra.mxu0 0.0
    %1415 = vmatprep.subr.mxu0 0.0
    %1416 = vmatpush1.msra.mxu0 0.0
    %1417 = vmatprep.subr.mxu0 0.0
    %1418 = vmatpush1.msra.mxu0 0.0
    %1419 = vmatprep.subr.mxu0 0.0
    %1420 = vmatpush1.msra.mxu0 0.0
    %1421 = vmatprep.subr.mxu0 0.0
    %1422 = vmatpush1.msra.mxu0 0.0
    %1423 = vmatprep.subr.mxu0 0.0
    %1424 = vmatpush1.msra.mxu0 0.0
    %1425 = vmatprep.subr.mxu0 0.0
    %1426 = vmatpush1.msra.mxu0 0.0
    %1427 = vmatprep.subr.mxu0 0.0
    %1428 = vmatpush1.msra.mxu0 0.0
    %1429 = vmatprep.subr.mxu0 0.0
    %1430 = vmatpush1.msra.mxu0 0.0
    %1431 = vmatprep.subr.mxu0 0.0
    %1432 = vmatpush1.msra.mxu0 0.0
    %1433 = vmatprep.subr.mxu0 0.0
    %1434 = vmatpush1.msra.mxu0 0.0
    %1435 = vmatprep.subr.mxu0 0.0
    %1436 = vmatpush1.msra.mxu0 0.0
    %1437 = vmatprep.subr.mxu0 0.0
    %1438 = vmatpush1.msra.mxu0 0.0
    %1439 = vmatprep.subr.mxu0 0.0
    %1440 = vmatpush1.msra.mxu0 0.0
    %1441 = vmatprep.subr.mxu0 0.0
    %1442 = vmatpush1.msra.mxu0 0.0
    %1443 = vmatprep.subr.mxu0 0.0
    %1444 = vmatpush1.msra.mxu0 0.0
    %1445 = vmatprep.subr.mxu0 0.0
    %1446 = vmatpush1.msra.mxu0 0.0
    %1447 = vmatprep.subr.mxu0 0.0
    %1448 = vmatpush1.msra.mxu0 0.0
    %1449 = vmatprep.mubr.f32.mxu0 0.0
    %1450 = vmatmul.mubr.f32.gmra.mrb[0].mxu0 %v1380
    %v1451 = vpop.f32.mrb[0].mxu0
    %v1452 = vadd.f32 0.0, %v1451
    %v1453 = vpop.f32.mrb[0].mxu0
    %1454 = vmatprep.mubr.f32.mxu0 0.0
    %1455 = vmatmul.mubr.f32.gmra.mrb[0].mxu0 %v1383
    %v1456 = vpop.f32.mrb[0].mxu0
    %v1457 = vadd.f32 0.0, %v1456
    %v1458 = vpop.f32.mrb[0].mxu0
    %1459 = vdwg.mxu0
    %v1460 = vadd.f32 %v1029, %v1452
    %v1461 = vadd.f32 %v1034, %v1457
    %1462 = vrot.lane.b32.xlu0 %v177, 104
    %v1463 = vpop.permute.xlu0 %1462
    %1464 = vrot.lane.b32.xlu0 %v177, 72
    %v1465 = vpop.permute.xlu0 %1464
    %v1466 = vsel %vm194, %v1463, 0
    %v1468 = vsel %vm194, %v1465, 0
    %1470 = vmatprep.subr.mxu0 0.0
    %1471 = vmatpush1.xpose.msra.mxu0 %v1468
    %1472 = vmatprep.subr.mxu0 0.0
    %1473 = vmatpush1.xpose.msra.mxu0 0.0
    %1474 = vmatprep.subr.mxu0 0.0
    %1475 = vmatpush1.xpose.msra.mxu0 0.0
    %1476 = vmatprep.subr.mxu0 0.0
    %1477 = vmatpush1.xpose.msra.mxu0 0.0
    %1478 = vmatprep.subr.mxu0 0.0
    %1479 = vmatpush1.xpose.msra.mxu0 0.0
    %1480 = vmatprep.subr.mxu0 0.0
    %1481 = vmatpush1.xpose.msra.mxu0 0.0
    %1482 = vmatprep.subr.mxu0 0.0
    %1483 = vmatpush1.xpose.msra.mxu0 0.0
    %1484 = vmatprep.subr.mxu0 0.0
    %1485 = vmatpush1.xpose.msra.mxu0 0.0
    %1486 = vmatprep.subr.mxu0 0.0
    %1487 = vmatpush1.xpose.msra.mxu0 0.0
    %1488 = vmatprep.subr.mxu0 0.0
    %1489 = vmatpush1.xpose.msra.mxu0 0.0
    %1490 = vmatprep.subr.mxu0 0.0
    %1491 = vmatpush1.xpose.msra.mxu0 0.0
    %1492 = vmatprep.subr.mxu0 0.0
    %1493 = vmatpush1.xpose.msra.mxu0 0.0
    %1494 = vmatprep.subr.mxu0 0.0
    %1495 = vmatpush1.xpose.msra.mxu0 0.0
    %1496 = vmatprep.subr.mxu0 0.0
    %1497 = vmatpush1.xpose.msra.mxu0 0.0
    %1498 = vmatprep.subr.mxu0 0.0
    %1499 = vmatpush1.xpose.msra.mxu0 0.0
    %1500 = vmatprep.subr.mxu0 0.0
    %1501 = vmatpush1.xpose.msra.mxu0 0.0
    %1502 = vmatprep.subr.mxu0 0.0
    %1503 = vmatpush1.xpose.msra.mxu0 0.0
    %1504 = vmatprep.subr.mxu0 0.0
    %1505 = vmatpush1.xpose.msra.mxu0 0.0
    %1506 = vmatprep.subr.mxu0 0.0
    %1507 = vmatpush1.xpose.msra.mxu0 0.0
    %1508 = vmatprep.subr.mxu0 0.0
    %1509 = vmatpush1.xpose.msra.mxu0 0.0
    %1510 = vmatprep.subr.mxu0 0.0
    %1511 = vmatpush1.xpose.msra.mxu0 0.0
    %1512 = vmatprep.subr.mxu0 0.0
    %1513 = vmatpush1.xpose.msra.mxu0 0.0
    %1514 = vmatprep.subr.mxu0 0.0
    %1515 = vmatpush1.xpose.msra.mxu0 0.0
    %1516 = vmatprep.subr.mxu0 0.0
    %1517 = vmatpush1.xpose.msra.mxu0 0.0
    %1518 = vmatprep.subr.mxu0 0.0
    %1519 = vmatpush1.xpose.msra.mxu0 0.0
    %1520 = vmatprep.subr.mxu0 0.0
    %1521 = vmatpush1.xpose.msra.mxu0 0.0
    %1522 = vmatprep.subr.mxu0 0.0
    %1523 = vmatpush1.xpose.msra.mxu0 0.0
    %1524 = vmatprep.subr.mxu0 0.0
    %1525 = vmatpush1.xpose.msra.mxu0 0.0
    %1526 = vmatprep.subr.mxu0 0.0
    %1527 = vmatpush1.xpose.msra.mxu0 0.0
    %1528 = vmatprep.subr.mxu0 0.0
    %1529 = vmatpush1.xpose.msra.mxu0 0.0
    %1530 = vmatprep.subr.mxu0 0.0
    %1531 = vmatpush1.xpose.msra.mxu0 0.0
    %1532 = vmatprep.subr.mxu0 0.0
    %1533 = vmatpush1.xpose.msra.mxu0 0.0
    %1534 = vmatprep.mubr.f32.mxu0 0.0
    %1535 = vmatmul.mubr.f32.gmra.mrb[0].mxu0 %v1466
    %v1536 = vpop.f32.mrb[0].mxu0
    %v1537 = vadd.f32 0.0, %v1536
    %v1538 = vpop.f32.mrb[0].mxu0
    %1539 = vdwg.mxu0
    %1540 = vrot.lane.b32.xlu0 %v182, 104
    %v1541 = vpop.permute.xlu0 %1540
    %1542 = vrot.lane.b32.xlu0 %v182, 72
    %v1543 = vpop.permute.xlu0 %1542
    %v1544 = vsel %vm194, %v1541, 0
    %v1546 = vsel %vm194, %v1543, 0
    %1548 = vmatprep.subr.mxu0 0.0
    %1549 = vmatpush1.xpose.msra.mxu0 %v1546
    %1550 = vmatprep.subr.mxu0 0.0
    %1551 = vmatpush1.xpose.msra.mxu0 0.0
    %1552 = vmatprep.subr.mxu0 0.0
    %1553 = vmatpush1.xpose.msra.mxu0 0.0
    %1554 = vmatprep.subr.mxu0 0.0
    %1555 = vmatpush1.xpose.msra.mxu0 0.0
    %1556 = vmatprep.subr.mxu0 0.0
    %1557 = vmatpush1.xpose.msra.mxu0 0.0
    %1558 = vmatprep.subr.mxu0 0.0
    %1559 = vmatpush1.xpose.msra.mxu0 0.0
    %1560 = vmatprep.subr.mxu0 0.0
    %1561 = vmatpush1.xpose.msra.mxu0 0.0
    %1562 = vmatprep.subr.mxu0 0.0
    %1563 = vmatpush1.xpose.msra.mxu0 0.0
    %1564 = vmatprep.subr.mxu0 0.0
    %1565 = vmatpush1.xpose.msra.mxu0 0.0
    %1566 = vmatprep.subr.mxu0 0.0
    %1567 = vmatpush1.xpose.msra.mxu0 0.0
    %1568 = vmatprep.subr.mxu0 0.0
    %1569 = vmatpush1.xpose.msra.mxu0 0.0
    %1570 = vmatprep.subr.mxu0 0.0
    %1571 = vmatpush1.xpose.msra.mxu0 0.0
    %1572 = vmatprep.subr.mxu0 0.0
    %1573 = vmatpush1.xpose.msra.mxu0 0.0
    %1574 = vmatprep.subr.mxu0 0.0
    %1575 = vmatpush1.xpose.msra.mxu0 0.0
    %1576 = vmatprep.subr.mxu0 0.0
    %1577 = vmatpush1.xpose.msra.mxu0 0.0
    %1578 = vmatprep.subr.mxu0 0.0
    %1579 = vmatpush1.xpose.msra.mxu0 0.0
    %1580 = vmatprep.subr.mxu0 0.0
    %1581 = vmatpush1.xpose.msra.mxu0 0.0
    %1582 = vmatprep.subr.mxu0 0.0
    %1583 = vmatpush1.xpose.msra.mxu0 0.0
    %1584 = vmatprep.subr.mxu0 0.0
    %1585 = vmatpush1.xpose.msra.mxu0 0.0
    %1586 = vmatprep.subr.mxu0 0.0
    %1587 = vmatpush1.xpose.msra.mxu0 0.0
    %1588 = vmatprep.subr.mxu0 0.0
    %1589 = vmatpush1.xpose.msra.mxu0 0.0
    %1590 = vmatprep.subr.mxu0 0.0
    %1591 = vmatpush1.xpose.msra.mxu0 0.0
    %1592 = vmatprep.subr.mxu0 0.0
    %1593 = vmatpush1.xpose.msra.mxu0 0.0
    %1594 = vmatprep.subr.mxu0 0.0
    %1595 = vmatpush1.xpose.msra.mxu0 0.0
    %1596 = vmatprep.subr.mxu0 0.0
    %1597 = vmatpush1.xpose.msra.mxu0 0.0
    %1598 = vmatprep.subr.mxu0 0.0
    %1599 = vmatpush1.xpose.msra.mxu0 0.0
    %1600 = vmatprep.subr.mxu0 0.0
    %1601 = vmatpush1.xpose.msra.mxu0 0.0
    %1602 = vmatprep.subr.mxu0 0.0
    %1603 = vmatpush1.xpose.msra.mxu0 0.0
    %1604 = vmatprep.subr.mxu0 0.0
    %1605 = vmatpush1.xpose.msra.mxu0 0.0
    %1606 = vmatprep.subr.mxu0 0.0
    %1607 = vmatpush1.xpose.msra.mxu0 0.0
    %1608 = vmatprep.subr.mxu0 0.0
    %1609 = vmatpush1.xpose.msra.mxu0 0.0
    %1610 = vmatprep.subr.mxu0 0.0
    %1611 = vmatpush1.xpose.msra.mxu0 0.0
    %1612 = vmatprep.mubr.f32.mxu0 0.0
    %1613 = vmatmul.mubr.f32.gmra.mrb[0].mxu0 %v1544
    %v1614 = vpop.f32.mrb[0].mxu0
    %v1615 = vadd.f32 0.0, %v1614
    %v1616 = vpop.f32.mrb[0].mxu0
    %1617 = vdwg.mxu0
    %v1618 = vmul.f32 %v1537, 0.35355338
    %v1619 = vmul.f32 %v1615, 0.35355338
    %v1620 = vadd.f32 %v1618, %v185
    %v1621 = vadd.f32 %v1619, %v186
    %v1622 = vsel %vm194, %v1620, -inf
    %1623 = vmax.xlane.f32.xlu0 %v1622
    %v1624 = vpop.xlane.xlu0 %1623
    %v1625 = vsel %vm194, %v1621, -inf
    %1626 = vmax.xlane.f32.xlu0 %v1625
    %v1627 = vpop.xlane.xlu0 %1626
    %v1628 = vsub.f32 %v1620, %v1624
    %v1629 = vsub.f32 %v1621, %v1627
    %v1630 = vmul.f32 %v1628, 1.442695
    %v1631 = vpow.pop %v1630
    %v1632 = vmul.f32 %v1629, 1.442695
    %v1633 = vpow.pop %v1632
    %v1634 = vsel %vm194, %v1631, 0.0
    %1635 = vadd.xlane.f32.xlu0 %v1634
    %v1636 = vpop.xlane.xlu0 %1635
    %v1637 = vsel %vm194, %v1633, 0.0
    %1638 = vadd.xlane.f32.xlu0 %v1637
    %v1639 = vpop.xlane.xlu0 %1638
    %v1640 = vrcp.pop %v1636
    %v1641 = vrcp.pop %v1639
    %v1642 = vmul.f32 %v1631, %v1640
    %v1643 = vmul.f32 %v1633, %v1641
    %1644 = vrot.lane.b32.xlu0 %v177, 40
    %v1645 = vpop.permute.xlu0 %1644
    %v1648 = vsel %vm194, %v1642, 0
    %1650 = vmatprep.subr.mxu0 0.0
    %1651 = vmatpush1.msra.mxu0 %v1645
    %1652 = vmatprep.subr.mxu0 0.0
    %1653 = vmatpush1.msra.mxu0 0.0
    %1654 = vmatprep.subr.mxu0 0.0
    %1655 = vmatpush1.msra.mxu0 0.0
    %1656 = vmatprep.subr.mxu0 0.0
    %1657 = vmatpush1.msra.mxu0 0.0
    %1658 = vmatprep.subr.mxu0 0.0
    %1659 = vmatpush1.msra.mxu0 0.0
    %1660 = vmatprep.subr.mxu0 0.0
    %1661 = vmatpush1.msra.mxu0 0.0
    %1662 = vmatprep.subr.mxu0 0.0
    %1663 = vmatpush1.msra.mxu0 0.0
    %1664 = vmatprep.subr.mxu0 0.0
    %1665 = vmatpush1.msra.mxu0 0.0
    %1666 = vmatprep.subr.mxu0 0.0
    %1667 = vmatpush1.msra.mxu0 0.0
    %1668 = vmatprep.subr.mxu0 0.0
    %1669 = vmatpush1.msra.mxu0 0.0
    %1670 = vmatprep.subr.mxu0 0.0
    %1671 = vmatpush1.msra.mxu0 0.0
    %1672 = vmatprep.subr.mxu0 0.0
    %1673 = vmatpush1.msra.mxu0 0.0
    %1674 = vmatprep.subr.mxu0 0.0
    %1675 = vmatpush1.msra.mxu0 0.0
    %1676 = vmatprep.subr.mxu0 0.0
    %1677 = vmatpush1.msra.mxu0 0.0
    %1678 = vmatprep.subr.mxu0 0.0
    %1679 = vmatpush1.msra.mxu0 0.0
    %1680 = vmatprep.subr.mxu0 0.0
    %1681 = vmatpush1.msra.mxu0 0.0
    %1682 = vmatprep.subr.mxu0 0.0
    %1683 = vmatpush1.msra.mxu0 0.0
    %1684 = vmatprep.subr.mxu0 0.0
    %1685 = vmatpush1.msra.mxu0 0.0
    %1686 = vmatprep.subr.mxu0 0.0
    %1687 = vmatpush1.msra.mxu0 0.0
    %1688 = vmatprep.subr.mxu0 0.0
    %1689 = vmatpush1.msra.mxu0 0.0
    %1690 = vmatprep.subr.mxu0 0.0
    %1691 = vmatpush1.msra.mxu0 0.0
    %1692 = vmatprep.subr.mxu0 0.0
    %1693 = vmatpush1.msra.mxu0 0.0
    %1694 = vmatprep.subr.mxu0 0.0
    %1695 = vmatpush1.msra.mxu0 0.0
    %1696 = vmatprep.subr.mxu0 0.0
    %1697 = vmatpush1.msra.mxu0 0.0
    %1698 = vmatprep.subr.mxu0 0.0
    %1699 = vmatpush1.msra.mxu0 0.0
    %1700 = vmatprep.subr.mxu0 0.0
    %1701 = vmatpush1.msra.mxu0 0.0
    %1702 = vmatprep.subr.mxu0 0.0
    %1703 = vmatpush1.msra.mxu0 0.0
    %1704 = vmatprep.subr.mxu0 0.0
    %1705 = vmatpush1.msra.mxu0 0.0
    %1706 = vmatprep.subr.mxu0 0.0
    %1707 = vmatpush1.msra.mxu0 0.0
    %1708 = vmatprep.subr.mxu0 0.0
    %1709 = vmatpush1.msra.mxu0 0.0
    %1710 = vmatprep.subr.mxu0 0.0
    %1711 = vmatpush1.msra.mxu0 0.0
    %1712 = vmatprep.subr.mxu0 0.0
    %1713 = vmatpush1.msra.mxu0 0.0
    %1714 = vmatprep.mubr.f32.mxu0 0.0
    %1715 = vmatmul.mubr.f32.gmra.mrb[0].mxu0 %v1648
    %v1716 = vpop.f32.mrb[0].mxu0
    %v1717 = vadd.f32 0.0, %v1716
    %v1718 = vpop.f32.mrb[0].mxu0
    %1719 = vdwg.mxu0
    %1720 = vrot.lane.b32.xlu0 %v182, 40
    %v1721 = vpop.permute.xlu0 %1720
    %v1724 = vsel %vm194, %v1643, 0
    %1726 = vmatprep.subr.mxu0 0.0
    %1727 = vmatpush1.msra.mxu0 %v1721
    %1728 = vmatprep.subr.mxu0 0.0
    %1729 = vmatpush1.msra.mxu0 0.0
    %1730 = vmatprep.subr.mxu0 0.0
    %1731 = vmatpush1.msra.mxu0 0.0
    %1732 = vmatprep.subr.mxu0 0.0
    %1733 = vmatpush1.msra.mxu0 0.0
    %1734 = vmatprep.subr.mxu0 0.0
    %1735 = vmatpush1.msra.mxu0 0.0
    %1736 = vmatprep.subr.mxu0 0.0
    %1737 = vmatpush1.msra.mxu0 0.0
    %1738 = vmatprep.subr.mxu0 0.0
    %1739 = vmatpush1.msra.mxu0 0.0
    %1740 = vmatprep.subr.mxu0 0.0
    %1741 = vmatpush1.msra.mxu0 0.0
    %1742 = vmatprep.subr.mxu0 0.0
    %1743 = vmatpush1.msra.mxu0 0.0
    %1744 = vmatprep.subr.mxu0 0.0
    %1745 = vmatpush1.msra.mxu0 0.0
    %1746 = vmatprep.subr.mxu0 0.0
    %1747 = vmatpush1.msra.mxu0 0.0
    %1748 = vmatprep.subr.mxu0 0.0
    %1749 = vmatpush1.msra.mxu0 0.0
    %1750 = vmatprep.subr.mxu0 0.0
    %1751 = vmatpush1.msra.mxu0 0.0
    %1752 = vmatprep.subr.mxu0 0.0
    %1753 = vmatpush1.msra.mxu0 0.0
    %1754 = vmatprep.subr.mxu0 0.0
    %1755 = vmatpush1.msra.mxu0 0.0
    %1756 = vmatprep.subr.mxu0 0.0
    %1757 = vmatpush1.msra.mxu0 0.0
    %1758 = vmatprep.subr.mxu0 0.0
    %1759 = vmatpush1.msra.mxu0 0.0
    %1760 = vmatprep.subr.mxu0 0.0
    %1761 = vmatpush1.msra.mxu0 0.0
    %1762 = vmatprep.subr.mxu0 0.0
    %1763 = vmatpush1.msra.mxu0 0.0
    %1764 = vmatprep.subr.mxu0 0.0
    %1765 = vmatpush1.msra.mxu0 0.0
    %1766 = vmatprep.subr.mxu0 0.0
    %1767 = vmatpush1.msra.mxu0 0.0
    %1768 = vmatprep.subr.mxu0 0.0
    %1769 = vmatpush1.msra.mxu0 0.0
    %1770 = vmatprep.subr.mxu0 0.0
    %1771 = vmatpush1.msra.mxu0 0.0
    %1772 = vmatprep.subr.mxu0 0.0
    %1773 = vmatpush1.msra.mxu0 0.0
    %1774 = vmatprep.subr.mxu0 0.0
    %1775 = vmatpush1.msra.mxu0 0.0
    %1776 = vmatprep.subr.mxu0 0.0
    %1777 = vmatpush1.msra.mxu0 0.0
    %1778 = vmatprep.subr.mxu0 0.0
    %1779 = vmatpush1.msra.mxu0 0.0
    %1780 = vmatprep.subr.mxu0 0.0
    %1781 = vmatpush1.msra.mxu0 0.0
    %1782 = vmatprep.subr.mxu0 0.0
    %1783 = vmatpush1.msra.mxu0 0.0
    %1784 = vmatprep.subr.mxu0 0.0
    %1785 = vmatpush1.msra.mxu0 0.0
    %1786 = vmatprep.subr.mxu0 0.0
    %1787 = vmatpush1.msra.mxu0 0.0
    %1788 = vmatprep.subr.mxu0 0.0
    %1789 = vmatpush1.msra.mxu0 0.0
    %1790 = vmatprep.mubr.f32.mxu0 0.0
    %1791 = vmatmul.mubr.f32.gmra.mrb[0].mxu0 %v1724
    %v1792 = vpop.f32.mrb[0].mxu0
    %v1793 = vadd.f32 0.0, %v1792
    %v1794 = vpop.f32.mrb[0].mxu0
    %1795 = vdwg.mxu0
    %v1796 = vsel %vm194, %v1717, 0.0
    %1797 = vadd.xlane.f32.xlu0 %v1796
    %v1798 = vpop.xlane.xlu0 %1797
    %v1799 = vsel %vm194, %v1793, 0.0
    %1800 = vadd.xlane.f32.xlu0 %v1799
    %v1801 = vpop.xlane.xlu0 %1800
    %v1802 = vmul.f32 %v1798, %v530
    %v1803 = vmul.f32 %v1801, %v530
    %v1805 = vsel %vm194, %v1717, 0
    %v1808 = vsel %vm194, %v1793, 0
    %1810 = vmatprep.subr.mxu0 0.0
    %1811 = vmatpush1.msra.mxu0 %v190
    %1812 = vmatprep.subr.mxu0 0.0
    %1813 = vmatpush1.msra.mxu0 0.0
    %1814 = vmatprep.subr.mxu0 0.0
    %1815 = vmatpush1.msra.mxu0 0.0
    %1816 = vmatprep.subr.mxu0 0.0
    %1817 = vmatpush1.msra.mxu0 0.0
    %1818 = vmatprep.subr.mxu0 0.0
    %1819 = vmatpush1.msra.mxu0 0.0
    %1820 = vmatprep.subr.mxu0 0.0
    %1821 = vmatpush1.msra.mxu0 0.0
    %1822 = vmatprep.subr.mxu0 0.0
    %1823 = vmatpush1.msra.mxu0 0.0
    %1824 = vmatprep.subr.mxu0 0.0
    %1825 = vmatpush1.msra.mxu0 0.0
    %1826 = vmatprep.subr.mxu0 0.0
    %1827 = vmatpush1.msra.mxu0 0.0
    %1828 = vmatprep.subr.mxu0 0.0
    %1829 = vmatpush1.msra.mxu0 0.0
    %1830 = vmatprep.subr.mxu0 0.0
    %1831 = vmatpush1.msra.mxu0 0.0
    %1832 = vmatprep.subr.mxu0 0.0
    %1833 = vmatpush1.msra.mxu0 0.0
    %1834 = vmatprep.subr.mxu0 0.0
    %1835 = vmatpush1.msra.mxu0 0.0
    %1836 = vmatprep.subr.mxu0 0.0
    %1837 = vmatpush1.msra.mxu0 0.0
    %1838 = vmatprep.subr.mxu0 0.0
    %1839 = vmatpush1.msra.mxu0 0.0
    %1840 = vmatprep.subr.mxu0 0.0
    %1841 = vmatpush1.msra.mxu0 0.0
    %1842 = vmatprep.subr.mxu0 0.0
    %1843 = vmatpush1.msra.mxu0 0.0
    %1844 = vmatprep.subr.mxu0 0.0
    %1845 = vmatpush1.msra.mxu0 0.0
    %1846 = vmatprep.subr.mxu0 0.0
    %1847 = vmatpush1.msra.mxu0 0.0
    %1848 = vmatprep.subr.mxu0 0.0
    %1849 = vmatpush1.msra.mxu0 0.0
    %1850 = vmatprep.subr.mxu0 0.0
    %1851 = vmatpush1.msra.mxu0 0.0
    %1852 = vmatprep.subr.mxu0 0.0
    %1853 = vmatpush1.msra.mxu0 0.0
    %1854 = vmatprep.subr.mxu0 0.0
    %1855 = vmatpush1.msra.mxu0 0.0
    %1856 = vmatprep.subr.mxu0 0.0
    %1857 = vmatpush1.msra.mxu0 0.0
    %1858 = vmatprep.subr.mxu0 0.0
    %1859 = vmatpush1.msra.mxu0 0.0
    %1860 = vmatprep.subr.mxu0 0.0
    %1861 = vmatpush1.msra.mxu0 0.0
    %1862 = vmatprep.subr.mxu0 0.0
    %1863 = vmatpush1.msra.mxu0 0.0
    %1864 = vmatprep.subr.mxu0 0.0
    %1865 = vmatpush1.msra.mxu0 0.0
    %1866 = vmatprep.subr.mxu0 0.0
    %1867 = vmatpush1.msra.mxu0 0.0
    %1868 = vmatprep.subr.mxu0 0.0
    %1869 = vmatpush1.msra.mxu0 0.0
    %1870 = vmatprep.subr.mxu0 0.0
    %1871 = vmatpush1.msra.mxu0 0.0
    %1872 = vmatprep.subr.mxu0 0.0
    %1873 = vmatpush1.msra.mxu0 0.0
    %1874 = vmatprep.mubr.f32.mxu0 0.0
    %1875 = vmatmul.mubr.f32.gmra.mrb[0].mxu0 %v1805
    %v1876 = vpop.f32.mrb[0].mxu0
    %v1877 = vadd.f32 0.0, %v1876
    %v1878 = vpop.f32.mrb[0].mxu0
    %1879 = vmatprep.mubr.f32.mxu0 0.0
    %1880 = vmatmul.mubr.f32.gmra.mrb[0].mxu0 %v1808
    %v1881 = vpop.f32.mrb[0].mxu0
    %v1882 = vadd.f32 0.0, %v1881
    %v1883 = vpop.f32.mrb[0].mxu0
    %1884 = vdwg.mxu0
    %v1885 = vadd.f32 %v1460, %v1877
    %v1886 = vadd.f32 %v1461, %v1882
    %v1887 = vld [vmem:[%s5] sm:$0x1]
    %v1889 = vlaneseq
    %v1890 = vshrl.u32 %v1889, 7
    %v1891 = vsub.s32 0, %v1890
    %v1892 = vrot.slane %v1887, %v1891
    %v1894 = vadd.f32 %v1885, %v1892
    %v1895 = vadd.f32 %v1886, %v1892
    %vm1896 = vcmask 261120
    %1897 = vst.msk [vmem:[#allocation10] sm:$0xff] %vm1896, %v1894
    %1898 = vst.msk [vmem:[#allocation10 + $0x8] sm:$0xff] %vm1896, %v1895
    %v1901 = vlaneseq
    %v1902 = vand.u32 %v1901, 127
    %v1903 = vlaneseq
    %v1904 = vshrl.u32 %v1903, 7
    %v1905 = vsub.s32 %v1902, %v1904
    %v1906 = vrot.slane %v531, %v1905
    %v1907 = vlaneseq
    %v1908 = vshrl.u32 %v1907, 7
    %v1909 = vsub.s32 %v1902, %v1908
    %v1910 = vrot.slane %v532, %v1909
    %vm1911 = vcmask 1041409
    %v1912 = vsel %vm1911, %v1910, %v1906
    %v1916 = vadd.s32 %v1902, 4294967288
    %v1917 = vlaneseq
    %v1918 = vshrl.u32 %v1917, 7
    %v1919 = vsub.s32 %v1916, %v1918
    %v1920 = vrot.slane %v873, %v1919
    %v1921 = vlaneseq
    %v1922 = vshrl.u32 %v1921, 7
    %v1923 = vsub.s32 %v1916, %v1922
    %v1924 = vrot.slane %v874, %v1923
    %v1925 = vsel %vm1911, %v1924, %v1920
    %v1929 = vadd.s32 %v1902, 4294967280
    %v1930 = vlaneseq
    %v1931 = vshrl.u32 %v1930, 7
    %v1932 = vsub.s32 %v1929, %v1931
    %v1933 = vrot.slane %v1377, %v1932
    %v1934 = vlaneseq
    %v1935 = vshrl.u32 %v1934, 7
    %v1936 = vsub.s32 %v1929, %v1935
    %v1937 = vrot.slane %v1378, %v1936
    %v1938 = vsel %vm1911, %v1937, %v1933
    %v1942 = vadd.s32 %v1902, 4294967272
    %v1943 = vlaneseq
    %v1944 = vshrl.u32 %v1943, 7
    %v1945 = vsub.s32 %v1942, %v1944
    %v1946 = vrot.slane %v1802, %v1945
    %v1947 = vlaneseq
    %v1948 = vshrl.u32 %v1947, 7
    %v1949 = vsub.s32 %v1942, %v1948
    %v1950 = vrot.slane %v1803, %v1949
    %v1951 = vsel %vm1911, %v1950, %v1946
    %v1953 = vsel %vm194, %v1912, %v1925
    %vm1954 = vcmask 130048
    %v1955 = vsel %vm1954, %v1953, %v1938
    %vm1956 = vcmask 195584
    %v1957 = vsel %vm1956, %v1955, %v1951
    %vm1958 = vcmask 254976
    %1959 = vst.msk [vmem:[#allocation11] sm:$0x3] %vm1958, %v1957
    // Predicated region
    $region42: #{tpu_custom_call.1} parent=1 // pred_check
      _
    $region43: #{tpu_custom_call.1} parent=1 // pred_check_branch
      %1961 = sbr.rel (0) target = $region45
    $region44: #{tpu_custom_call.1} parent=1 // pred_region
      %s1963 = ssub.s32 256, 256
      %1964 = vsyncadd [#allocation4], %s1963
      %s1965 = sshll.u32 [#allocation10], 4
      %s1966 = int_to_ptr.vmem [resolvable:$true] %s1965
      %1971 = dma.vmem_to_hbm [thread:$0]  %s1966, 256, %s6, [#allocation4], 128, 128, 8
    $region45: #{tpu_custom_call.1} parent=1 // pred_fallthru
      _
    // Predicated region
    $region46: #{tpu_custom_call.1} parent=1 // pred_check
      _
    $region47: #{tpu_custom_call.1} parent=1 // pred_check_branch
      %1973 = sbr.rel (0) target = $region49
    $region48: #{tpu_custom_call.1} parent=1 // pred_region
      %s1975 = ssub.s32 32, 32
      %1976 = vsyncadd [#allocation12], %s1975
      %s1978 = sshll.u32 [#allocation11], 4
      %s1979 = int_to_ptr.vmem [resolvable:$true] %s1978
      %1981 = dma.vmem_to_hbm [thread:$0]  %s1979, 32, %s7, [#allocation12]
    $region49: #{tpu_custom_call.1} parent=1 // pred_fallthru
      _
    // Predicated region
    $region50: #{tpu_custom_call.1} parent=1 // pred_check
      _
    $region51: #{tpu_custom_call.1} parent=1 // pred_check_branch
      %1983 = sbr.rel (0) target = $region53
    $region52: #{tpu_custom_call.1} parent=1 // pred_region
      %1984 = dma.done [#allocation4], 256
    $region53: #{tpu_custom_call.1} parent=1 // pred_fallthru
      _
    // Predicated region
    $region54: #{tpu_custom_call.1} parent=1 // pred_check
      _
    $region55: #{tpu_custom_call.1} parent=1 // pred_check_branch
      %1986 = sbr.rel (0) target = $region57
    $region56: #{tpu_custom_call.1} parent=1 // pred_region
      %1987 = dma.done [#allocation12], 32
    $region57: #{tpu_custom_call.1} parent=1 // pred_fallthru
      _
    %1988 = vsyncpa [#allocation3], 1
    %1989 = vsyncpa [#allocation6], 1
    %1990 = vsyncpa [#allocation9], 1
    %1991 = vsyncpa [#allocation4], 1
    %1992 = vsyncpa [#allocation12], 1

</llo_original>
